<compile_context>
chip_gen: v6e
topology: v6e:2x2x1
jax: 0.10.0
libtpu: 0.0.40
codegen_flags: <defaults>
</compile_context>

<pallas_src>
import numpy as np
import jax
import jax.numpy as jnp
from jax.experimental import pallas as pl
from jax.experimental.pallas import tpu as pltpu


# ------------------------------ Pallas kernels ------------------------------

def _fused_adapter_kernel(su3_ref, su4_ref, su5_ref, gate_ref,
                          k2t_ref, k4t_ref, wbd_ref, bias_ref, out_ref):
    """One batch element: both adapters (rgb + depth), end-to-end, fused.

    su* = xt* + yt* (hoisted, shared by both adapters).  gate_ref holds the six SCA
    gates (cols 0..2 rgb scales 3/4/5, cols 3..5 depth) precomputed in XLA.
    up2/up4 (bilinear, align_corners=True) are the precomputed Kronecker matrices
    k2t/k4t.  The ConvTranspose2d(32,1,4,8,0,4) channel contraction AND its disjoint
    4x4-block spatial scatter are folded into the block-diagonal (32,64) matrix wbd, so
    both adapters' live output pixels come out of ONE matmul as a (32,256) slab:
    rows 0..15 = rgb canvas [k*4+l, i*16+j], rows 16..31 = depth canvas.
    The final combine rgb + depth + rgb*depth happens here; the only HBM write is one
    lane-dense (16,256) tile of live pixels (bias-only pixels are filled host-side).
    """
    g = gate_ref[0]                                     # (32, 6)
    su3 = su3_ref[0]                                    # (32, 256)
    su4 = su4_ref[0]                                    # (32, 64)
    su5 = su5_ref[0]                                    # (32, 16)

    def softmax_ch(f):                                  # softmax over channels (axis 0)
        mx = jnp.max(f, axis=0, keepdims=True)
        e = jnp.exp(f - mx)
        return e / jnp.sum(e, axis=0, keepdims=True)    # exact division (parity)

    # sublane-stack rgb (top 32 rows) and depth (bottom 32 rows) per scale
    f3 = jnp.concatenate([softmax_ch(su3 * g[:, 0:1]),
                          softmax_ch(su3 * g[:, 3:4])], axis=0)      # (64, 256)
    f4 = jnp.concatenate([softmax_ch(su4 * g[:, 1:2]),
                          softmax_ch(su4 * g[:, 4:5])], axis=0)      # (64, 64)
    f5 = jnp.concatenate([softmax_ch(su5 * g[:, 2:3]),
                          softmax_ch(su5 * g[:, 5:6])], axis=0)      # (64, 16)

    # bilinear up2/up4 as single bf16 MXU matmuls shared by both adapters
    feat = (f3
            + jnp.dot(f4.astype(jnp.bfloat16), k2t_ref[...],
                      preferred_element_type=jnp.float32)
            + jnp.dot(f5.astype(jnp.bfloat16), k4t_ref[...],
                      preferred_element_type=jnp.float32))           # (64, 256) f32

    # ConvTranspose channel contraction + packed-row scatter, both adapters at once
    scat = jnp.dot(wbd_ref[...], feat.astype(jnp.bfloat16),
                   preferred_element_type=jnp.float32)               # (32, 256)

    bias = bias_ref[...]                                             # (1, 1)
    rgb = scat[0:16] + bias
    depth = scat[16:32] + bias
    out_ref[0] = rgb + depth + rgb * depth


# ------------------------------ wrappers (glue) ------------------------------

def fused_adapters(feats, params):
    """Both adapter() calls + the rgb/depth combination: gates in XLA, rest in one
    pallas_call, packed-canvas unpack (with constant bias-only fill) in XLA."""
    B = feats["xt3"].shape[0]
    flat = lambda a: a.reshape(a.shape[0], 32, -1)       # free reshape (NCHW -> N,C,HW)
    # hoisted xt+yt, shared by both adapters
    su3 = flat(feats["xt3"]) + flat(feats["yt3"])
    su4 = flat(feats["xt4"]) + flat(feats["yt4"])
    su5 = flat(feats["xt5"]) + flat(feats["yt5"])

    # --- SCA gate path in plain XLA (<1 KFLOP; fuses into the producers) ---
    # ShuffleChannelAttention = AdaptiveMaxPool2d(1) -> shuffle -> Conv1x1(32,4,pad=1)
    # -> ReLU -> Conv3x3(4,32) -> sigmoid; shuffle folded into w1's columns, only the
    # center 3x3 tap sees nonzero data on the zero-padded 1x1 map (w2 = center tap).
    pooled = jnp.stack(
        [feats["xs3"].max((2, 3)), feats["xs4"].max((2, 3)), feats["xs5"].max((2, 3)),
         feats["ys3"].max((2, 3)), feats["ys4"].max((2, 3)), feats["ys5"].max((2, 3))],
        axis=-1)                                                     # (B, 32, 6)
    h = jnp.maximum(jnp.einsum("oc,bcm->bom", params["w1"], pooled), 0.0)   # (B, 4, 6)
    gates = jax.nn.sigmoid(jnp.einsum("oc,bcm->bom", params["w2"], h))      # (B, 32, 6)

    def fspec(hw):
        return pl.BlockSpec((1, 32, hw), lambda b: (b, 0, 0))

    def wspec(shape):
        return pl.BlockSpec(shape, lambda b: (0,) * len(shape))

    out = pl.pallas_call(
        _fused_adapter_kernel,
        grid=(B,),
        in_specs=[fspec(256), fspec(64), fspec(16), fspec(6),
                  wspec((64, 256)), wspec((16, 256)), wspec((32, 64)), wspec((1, 1))],
        out_specs=pl.BlockSpec((1, 16, 256), lambda b: (b, 0, 0)),
        out_shape=jax.ShapeDtypeStruct((B, 16, 256), jnp.float32),
        compiler_params=pltpu.CompilerParams(dimension_semantics=("parallel",)),
    )(su3, su4, su5, gates,
      params["k2t"], params["k4t"], params["wbd"], params["ct_b"].reshape(1, 1))

    # unpack: live canvas rows [k*4+l, i*16+j] -> output pixel (8i+k, 8j+l), k,l < 4.
    # The other 75% of pixels are bias-only in BOTH adapters, so after the combine they
    # equal the constant 2*b + b^2.
    b0 = params["ct_b"][0]
    const = 2.0 * b0 + b0 * b0
    live = out.reshape(B, 4, 4, 16, 16).transpose(0, 3, 1, 4, 2)     # (B,16,4,16,4)
    canvas = jnp.full((B, 16, 8, 16, 8), const, jnp.float32)
    canvas = canvas.at[:, :, 0:4, :, 0:4].set(live)
    return canvas.reshape(B, 1, 128, 128)


def fused_losses(det_depth_t, gt, det_depth_s, det_rgb_s, det_rgb_t):
    """cal_score (IoU of det_depth_t vs gt) + both MSE distillation losses in one tiled
    pallas_call.  MSE(dds, iou) is expanded to (sum dds^2 - 2*iou*sum dds + N*iou^2)/N so
    the whole thing stays a single reduction pass over row tiles."""
    B = gt.shape[0]
    rows, cols = B * 128, 128
    tile = 128
    n_elems = float(rows * cols)
    r = lambda a: a.reshape(rows, cols)

    def kernel(ddt_ref, gt_ref, dds_ref, drs_ref, drt_ref,
               rgb_loss_ref, depth_loss_ref,
               over_ref, union_ref, sdds_ref, sdds2_ref, sdr2_ref):
        step = pl.program_id(0)

        @pl.when(step == 0)
        def _():
            over_ref[...] = jnp.zeros_like(over_ref)
            union_ref[...] = jnp.zeros_like(union_ref)
            sdds_ref[...] = jnp.zeros_like(sdds_ref)
            sdds2_ref[...] = jnp.zeros_like(sdds2_ref)
            sdr2_ref[...] = jnp.zeros_like(sdr2_ref)
            rgb_loss_ref[...] = jnp.zeros_like(rgb_loss_ref)
            depth_loss_ref[...] = jnp.zeros_like(depth_loss_ref)

        img = ddt_ref[...] * (1.0 / 255.0)
        gtn = gt_ref[...] * (1.0 / 255.0)
        imgb = jnp.where(img >= 0.5, 1.0, 0.0)
        gtb = jnp.where(gtn >= 0.5, 1.0, 0.0)
        over_ref[...] += jnp.sum(imgb * gtb, keepdims=True)
        union_ref[...] += jnp.sum(jnp.where(imgb + gtb >= 1.0, 1.0, 0.0), keepdims=True)

        dds = dds_ref[...]
        sdds_ref[...] += jnp.sum(dds, keepdims=True)
        sdds2_ref[...] += jnp.sum(dds * dds, keepdims=True)
        dr = drs_ref[...] - drt_ref[...]
        sdr2_ref[...] += jnp.sum(dr * dr, keepdims=True)

        @pl.when(step == pl.num_programs(0) - 1)
        def _():
            iou = over_ref[...] / (1e-07 + union_ref[...])            # (1, 1)
            depth_loss_ref[...] = (sdds2_ref[...] - 2.0 * iou * sdds_ref[...]
                                   + n_elems * iou * iou) * (1.0 / n_elems)
            rgb_loss_ref[...] = sdr2_ref[...] * (1.0 / n_elems)

    in_spec = pl.BlockSpec((tile, cols), lambda i: (i, 0))
    out_spec = pl.BlockSpec((1, 1), lambda i: (0, 0))
    rgb_l, depth_l = pl.pallas_call(
        kernel,
        grid=(rows // tile,),
        in_specs=[in_spec] * 5,
        out_specs=(out_spec, out_spec),
        out_shape=(jax.ShapeDtypeStruct((1, 1), jnp.float32),
                   jax.ShapeDtypeStruct((1, 1), jnp.float32)),
        scratch_shapes=[pltpu.VMEM((1, 1), jnp.float32)] * 5,
        compiler_params=pltpu.CompilerParams(dimension_semantics=("arbitrary",)),
    )(r(det_depth_t), r(gt), r(det_depth_s), r(det_rgb_s), r(det_rgb_t))
    return rgb_l[0, 0], depth_l[0, 0]


@jax.jit
def build_model_kd_forward(feats, gt, params):
    """Mirrors build_model_kd.forward given the (black-box) sub-network outputs.

    Note: the PyTorch adapter() re-randomizes its SCA / ConvTranspose weights on every
    call; here one shared parameter set is used for both adapter calls (same behavior
    as the previously accepted translation)."""
    final = fused_adapters(feats, params)
    loss_rgb, loss_depth = fused_losses(
        feats["det_depth_t"], gt, feats["det_depth_s"],
        feats["det_rgb_s"], jax.lax.stop_gradient(feats["det_rgb_t"]))   # .detach()
    return final, loss_rgb, loss_depth


# ------------------------------ parameter setup ------------------------------

def _bilinear_matrix(out_size, in_size):
    """1-D bilinear interpolation matrix, align_corners=True."""
    A = np.zeros((out_size, in_size), np.float32)
    scale = (in_size - 1) / (out_size - 1)
    for p in range(out_size):
        s = p * scale
        i0 = min(int(np.floor(s)), in_size - 1)
        w = s - i0
        A[p, i0] += 1.0 - w
        if i0 + 1 < in_size:
            A[p, i0 + 1] += w
    return A


def make_params(key):
    k1, k2, k3, k4 = jax.random.split(key, 4)
    # ShuffleChannelAttention.se[0]: Conv2d(32, 4, 1, padding=1, bias=False)
    w1 = jax.random.normal(k1, (4, 32), jnp.float32) * 0.1
    # fold the g=4 channel shuffle (view/permute/reshape of the pooled vector) into w1 cols
    perm = np.array([(k % 4) * 8 + (k // 4) for k in range(32)], dtype=np.int32)
    w1_folded = jnp.zeros((4, 32), jnp.float32).at[:, perm].set(w1)
    # ShuffleChannelAttention.se[2]: Conv2d(4, 32, 3, bias=False) — only the center tap
    # sees nonzero data on the zero-padded 1x1 map
    w2_full = jax.random.normal(k2, (32, 4, 3, 3), jnp.float32) * 0.1
    w2_center = w2_full[:, :, 1, 1]                                   # (32, 4)
    # up8 = ConvTranspose2d(32, 1, 4, 8, 0, 4): fold the 4x4 taps and the (k,l)->(k*4+l)
    # live-row scatter into a (16, 32) matrix, then block-diagonal it so rgb and depth
    # share one scatter matmul: wbd = diag(wscat16, wscat16) of shape (32, 64).
    ct_w = jax.random.normal(k3, (32, 1, 4, 4), jnp.float32) * 0.1
    ct_b = jax.random.normal(k4, (1,), jnp.float32) * 0.1
    wscat16 = ct_w.reshape(32, 16).T                                  # (16, 32)
    wbd = jnp.zeros((32, 64), jnp.float32)
    wbd = wbd.at[0:16, 0:32].set(wscat16).at[16:32, 32:64].set(wscat16)
    # bilinear upsample (align_corners=True) as separable matmuls -> Kronecker matrices
    A2 = _bilinear_matrix(16, 8)
    A4 = _bilinear_matrix(16, 4)
    k2t = jnp.asarray(np.kron(A2, A2).T)                              # (64, 256)
    k4t = jnp.asarray(np.kron(A4, A4).T)                              # (16, 256)
    return dict(w1=w1_folded, w2=w2_center, ct_b=ct_b,
                wbd=wbd.astype(jnp.bfloat16),
                k2t=k2t.astype(jnp.bfloat16),
                k4t=k4t.astype(jnp.bfloat16))


# ------------------------------------ main ------------------------------------

if __name__ == "__main__":
    key = jax.random.PRNGKey(0)
    keys = jax.random.split(key, 20)
    B = 2

    # TODO(synk): t_net_rgb / s_net_rgb / t_net_depth / s_net_depth are constructor-injected
    # black-box sub-networks; their outputs (det maps + multi-scale features) are synthesized
    # deterministically here instead of being computed from x / y.
    x = jax.random.normal(keys[0], (B, 3, 128, 128), jnp.float32)   # unused (black-box nets)
    y = jax.random.normal(keys[1], (B, 1, 128, 128), jnp.float32)   # unused (black-box nets)
    gt = jax.random.uniform(keys[2], (B, 1, 128, 128), jnp.float32, 0.0, 255.0)

    def fmap(k, h):
        return jax.random.normal(k, (B, 32, h, h), jnp.float32)

    feats = dict(
        xt3=fmap(keys[3], 16), xt4=fmap(keys[4], 8), xt5=fmap(keys[5], 4),
        yt3=fmap(keys[6], 16), yt4=fmap(keys[7], 8), yt5=fmap(keys[8], 4),
        xs3=fmap(keys[9], 16), xs4=fmap(keys[10], 8), xs5=fmap(keys[11], 4),
        ys3=fmap(keys[12], 16), ys4=fmap(keys[13], 8), ys5=fmap(keys[14], 4),
        det_rgb_t=jax.random.normal(keys[15], (B, 1, 128, 128), jnp.float32),
        det_rgb_s=jax.random.normal(keys[16], (B, 1, 128, 128), jnp.float32),
        det_depth_t=jax.random.uniform(keys[17], (B, 1, 128, 128), jnp.float32, 0.0, 255.0),
        det_depth_s=jax.random.normal(keys[18], (B, 1, 128, 128), jnp.float32),
    )
    params = make_params(keys[19])

    final, loss_rgb, loss_depth = build_model_kd_forward(feats, gt, params)
    jax.block_until_ready((final, loss_rgb, loss_depth))
    assert final.shape == (B, 1, 128, 128)
    assert final.dtype == jnp.float32
    print("KERNEL_OK")
</pallas_src>

<mosaic_0001>
module attributes {stable_mosaic.version = 11 : i64} {
  func.func @_fused_adapter_kernel(%arg0: i32, %arg1: memref<1x32x256xf32, #tpu.memory_space<vmem>>, %arg2: memref<1x32x64xf32, #tpu.memory_space<vmem>>, %arg3: memref<1x32x16xf32, #tpu.memory_space<vmem>>, %arg4: memref<1x32x6xf32, #tpu.memory_space<vmem>>, %arg5: memref<64x256xbf16, #tpu.memory_space<vmem>>, %arg6: memref<16x256xbf16, #tpu.memory_space<vmem>>, %arg7: memref<32x64xbf16, #tpu.memory_space<vmem>>, %arg8: memref<1x1xf32, #tpu.memory_space<vmem>>, %arg9: memref<1x16x256xf32, #tpu.memory_space<vmem>>) attributes {dimension_semantics = [#tpu.dimension_semantics<parallel>], iteration_bounds = array<i64: 2>, scalar_prefetch = 0 : i64, scratch_operands = 0 : i64, tpu.core_type = #tpu.core_type<tc>, window_params = [{transform_indices = @transform_0, window_bounds = array<i64: 1, 32, 256>}, {transform_indices = @transform_1, window_bounds = array<i64: 1, 32, 64>}, {transform_indices = @transform_2, window_bounds = array<i64: 1, 32, 16>}, {transform_indices = @transform_3, window_bounds = array<i64: 1, 32, 6>}, {pipeline_mode = #tpu.pipeline_mode<synchronous>, transform_indices = @transform_4, window_bounds = array<i64: 64, 256>}, {pipeline_mode = #tpu.pipeline_mode<synchronous>, transform_indices = @transform_5, window_bounds = array<i64: 16, 256>}, {pipeline_mode = #tpu.pipeline_mode<synchronous>, transform_indices = @transform_6, window_bounds = array<i64: 32, 64>}, {pipeline_mode = #tpu.pipeline_mode<synchronous>, transform_indices = @transform_7, window_bounds = array<i64: 1, 1>}, {transform_indices = @transform_8, window_bounds = array<i64: 1, 16, 256>}]} {
    %c0 = arith.constant 0 : index
    %c0_0 = arith.constant 0 : index
    %c0_1 = arith.constant 0 : index
    %0 = vector.load %arg4[%c0, %c0_0, %c0_1] : memref<1x32x6xf32, #tpu.memory_space<vmem>>, vector<1x32x6xf32>
    %1 = vector.shape_cast %0 : vector<1x32x6xf32> to vector<32x6xf32>
    %c0_2 = arith.constant 0 : index
    %c0_3 = arith.constant 0 : index
    %c0_4 = arith.constant 0 : index
    %2 = vector.load %arg1[%c0_2, %c0_3, %c0_4] : memref<1x32x256xf32, #tpu.memory_space<vmem>>, vector<1x32x256xf32>
    %3 = vector.shape_cast %2 : vector<1x32x256xf32> to vector<32x256xf32>
    %c0_5 = arith.constant 0 : index
    %c0_6 = arith.constant 0 : index
    %c0_7 = arith.constant 0 : index
    %4 = vector.load %arg2[%c0_5, %c0_6, %c0_7] : memref<1x32x64xf32, #tpu.memory_space<vmem>>, vector<1x32x64xf32>
    %5 = vector.shape_cast %4 : vector<1x32x64xf32> to vector<32x64xf32>
    %c0_8 = arith.constant 0 : index
    %c0_9 = arith.constant 0 : index
    %c0_10 = arith.constant 0 : index
    %6 = vector.load %arg3[%c0_8, %c0_9, %c0_10] : memref<1x32x16xf32, #tpu.memory_space<vmem>>, vector<1x32x16xf32>
    %7 = vector.shape_cast %6 : vector<1x32x16xf32> to vector<32x16xf32>
    %8 = vector.extract_strided_slice %1 {offsets = [0, 0], sizes = [32, 1], strides = [1, 1]} : vector<32x6xf32> to vector<32x1xf32>
    %9 = vector.broadcast %8 : vector<32x1xf32> to vector<32x256xf32>
    %10 = arith.mulf %3, %9 : vector<32x256xf32>
    %cst = arith.constant dense<0xFF800000> : vector<256xf32>
    %11 = vector.multi_reduction <maximumf>, %10, %cst [0] : vector<32x256xf32> to vector<256xf32>
    %12 = vector.shape_cast %11 : vector<256xf32> to vector<1x256xf32>
    %13 = vector.broadcast %12 : vector<1x256xf32> to vector<32x256xf32>
    %14 = arith.subf %10, %13 : vector<32x256xf32>
    %15 = math.exp %14 : vector<32x256xf32>
    %cst_11 = arith.constant dense<0.000000e+00> : vector<256xf32>
    %16 = vector.multi_reduction <add>, %15, %cst_11 [0] : vector<32x256xf32> to vector<256xf32>
    %17 = vector.shape_cast %16 : vector<256xf32> to vector<1x256xf32>
    %18 = vector.broadcast %17 : vector<1x256xf32> to vector<32x256xf32>
    %19 = arith.divf %15, %18 : vector<32x256xf32>
    %20 = vector.extract_strided_slice %1 {offsets = [0, 3], sizes = [32, 1], strides = [1, 1]} : vector<32x6xf32> to vector<32x1xf32>
    %21 = vector.broadcast %20 : vector<32x1xf32> to vector<32x256xf32>
    %22 = arith.mulf %3, %21 : vector<32x256xf32>
    %cst_12 = arith.constant dense<0xFF800000> : vector<256xf32>
    %23 = vector.multi_reduction <maximumf>, %22, %cst_12 [0] : vector<32x256xf32> to vector<256xf32>
    %24 = vector.shape_cast %23 : vector<256xf32> to vector<1x256xf32>
    %25 = vector.broadcast %24 : vector<1x256xf32> to vector<32x256xf32>
    %26 = arith.subf %22, %25 : vector<32x256xf32>
    %27 = math.exp %26 : vector<32x256xf32>
    %cst_13 = arith.constant dense<0.000000e+00> : vector<256xf32>
    %28 = vector.multi_reduction <add>, %27, %cst_13 [0] : vector<32x256xf32> to vector<256xf32>
    %29 = vector.shape_cast %28 : vector<256xf32> to vector<1x256xf32>
    %30 = vector.broadcast %29 : vector<1x256xf32> to vector<32x256xf32>
    %31 = arith.divf %27, %30 : vector<32x256xf32>
    %32 = tpu.concatenate %19, %31 in 0 : vector<32x256xf32>, vector<32x256xf32> -> vector<64x256xf32>
    %33 = vector.extract_strided_slice %1 {offsets = [0, 1], sizes = [32, 1], strides = [1, 1]} : vector<32x6xf32> to vector<32x1xf32>
    %34 = vector.broadcast %33 : vector<32x1xf32> to vector<32x64xf32>
    %35 = arith.mulf %5, %34 : vector<32x64xf32>
    %cst_14 = arith.constant dense<0xFF800000> : vector<64xf32>
    %36 = vector.multi_reduction <maximumf>, %35, %cst_14 [0] : vector<32x64xf32> to vector<64xf32>
    %37 = vector.shape_cast %36 : vector<64xf32> to vector<1x64xf32>
    %38 = vector.broadcast %37 : vector<1x64xf32> to vector<32x64xf32>
    %39 = arith.subf %35, %38 : vector<32x64xf32>
    %40 = math.exp %39 : vector<32x64xf32>
    %cst_15 = arith.constant dense<0.000000e+00> : vector<64xf32>
    %41 = vector.multi_reduction <add>, %40, %cst_15 [0] : vector<32x64xf32> to vector<64xf32>
    %42 = vector.shape_cast %41 : vector<64xf32> to vector<1x64xf32>
    %43 = vector.broadcast %42 : vector<1x64xf32> to vector<32x64xf32>
    %44 = arith.divf %40, %43 : vector<32x64xf32>
    %45 = vector.extract_strided_slice %1 {offsets = [0, 4], sizes = [32, 1], strides = [1, 1]} : vector<32x6xf32> to vector<32x1xf32>
    %46 = vector.broadcast %45 : vector<32x1xf32> to vector<32x64xf32>
    %47 = arith.mulf %5, %46 : vector<32x64xf32>
    %cst_16 = arith.constant dense<0xFF800000> : vector<64xf32>
    %48 = vector.multi_reduction <maximumf>, %47, %cst_16 [0] : vector<32x64xf32> to vector<64xf32>
    %49 = vector.shape_cast %48 : vector<64xf32> to vector<1x64xf32>
    %50 = vector.broadcast %49 : vector<1x64xf32> to vector<32x64xf32>
    %51 = arith.subf %47, %50 : vector<32x64xf32>
    %52 = math.exp %51 : vector<32x64xf32>
    %cst_17 = arith.constant dense<0.000000e+00> : vector<64xf32>
    %53 = vector.multi_reduction <add>, %52, %cst_17 [0] : vector<32x64xf32> to vector<64xf32>
    %54 = vector.shape_cast %53 : vector<64xf32> to vector<1x64xf32>
    %55 = vector.broadcast %54 : vector<1x64xf32> to vector<32x64xf32>
    %56 = arith.divf %52, %55 : vector<32x64xf32>
    %57 = tpu.concatenate %44, %56 in 0 : vector<32x64xf32>, vector<32x64xf32> -> vector<64x64xf32>
    %58 = vector.extract_strided_slice %1 {offsets = [0, 2], sizes = [32, 1], strides = [1, 1]} : vector<32x6xf32> to vector<32x1xf32>
    %59 = vector.broadcast %58 : vector<32x1xf32> to vector<32x16xf32>
    %60 = arith.mulf %7, %59 : vector<32x16xf32>
    %cst_18 = arith.constant dense<0xFF800000> : vector<16xf32>
    %61 = vector.multi_reduction <maximumf>, %60, %cst_18 [0] : vector<32x16xf32> to vector<16xf32>
    %62 = vector.shape_cast %61 : vector<16xf32> to vector<1x16xf32>
    %63 = vector.broadcast %62 : vector<1x16xf32> to vector<32x16xf32>
    %64 = arith.subf %60, %63 : vector<32x16xf32>
    %65 = math.exp %64 : vector<32x16xf32>
    %cst_19 = arith.constant dense<0.000000e+00> : vector<16xf32>
    %66 = vector.multi_reduction <add>, %65, %cst_19 [0] : vector<32x16xf32> to vector<16xf32>
    %67 = vector.shape_cast %66 : vector<16xf32> to vector<1x16xf32>
    %68 = vector.broadcast %67 : vector<1x16xf32> to vector<32x16xf32>
    %69 = arith.divf %65, %68 : vector<32x16xf32>
    %70 = vector.extract_strided_slice %1 {offsets = [0, 5], sizes = [32, 1], strides = [1, 1]} : vector<32x6xf32> to vector<32x1xf32>
    %71 = vector.broadcast %70 : vector<32x1xf32> to vector<32x16xf32>
    %72 = arith.mulf %7, %71 : vector<32x16xf32>
    %cst_20 = arith.constant dense<0xFF800000> : vector<16xf32>
    %73 = vector.multi_reduction <maximumf>, %72, %cst_20 [0] : vector<32x16xf32> to vector<16xf32>
    %74 = vector.shape_cast %73 : vector<16xf32> to vector<1x16xf32>
    %75 = vector.broadcast %74 : vector<1x16xf32> to vector<32x16xf32>
    %76 = arith.subf %72, %75 : vector<32x16xf32>
    %77 = math.exp %76 : vector<32x16xf32>
    %cst_21 = arith.constant dense<0.000000e+00> : vector<16xf32>
    %78 = vector.multi_reduction <add>, %77, %cst_21 [0] : vector<32x16xf32> to vector<16xf32>
    %79 = vector.shape_cast %78 : vector<16xf32> to vector<1x16xf32>
    %80 = vector.broadcast %79 : vector<1x16xf32> to vector<32x16xf32>
    %81 = arith.divf %77, %80 : vector<32x16xf32>
    %82 = tpu.concatenate %69, %81 in 0 : vector<32x16xf32>, vector<32x16xf32> -> vector<64x16xf32>
    %83 = arith.truncf %57 : vector<64x64xf32> to vector<64x64xbf16>
    %c0_22 = arith.constant 0 : index
    %c0_23 = arith.constant 0 : index
    %84 = vector.load %arg5[%c0_22, %c0_23] : memref<64x256xbf16, #tpu.memory_space<vmem>>, vector<64x256xbf16>
    %cst_24 = arith.constant dense<0.000000e+00> : vector<64x256xf32>
    %85 = tpu.matmul %83, %84, %cst_24 {dimension_numbers = #tpu.dot_dimension_numbers<[1], [0], [0], [1], [0, 0, 1, 1], [], []>} : vector<64x64xbf16>, vector<64x256xbf16>, vector<64x256xf32> -> vector<64x256xf32>
    %86 = arith.addf %32, %85 : vector<64x256xf32>
    %87 = arith.truncf %82 : vector<64x16xf32> to vector<64x16xbf16>
    %c0_25 = arith.constant 0 : index
    %c0_26 = arith.constant 0 : index
    %88 = vector.load %arg6[%c0_25, %c0_26] : memref<16x256xbf16, #tpu.memory_space<vmem>>, vector<16x256xbf16>
    %cst_27 = arith.constant dense<0.000000e+00> : vector<64x256xf32>
    %89 = tpu.matmul %87, %88, %cst_27 {dimension_numbers = #tpu.dot_dimension_numbers<[1], [0], [0], [1], [0, 0, 1, 1], [], []>} : vector<64x16xbf16>, vector<16x256xbf16>, vector<64x256xf32> -> vector<64x256xf32>
    %90 = arith.addf %86, %89 : vector<64x256xf32>
    %c0_28 = arith.constant 0 : index
    %c0_29 = arith.constant 0 : index
    %91 = vector.load %arg7[%c0_28, %c0_29] : memref<32x64xbf16, #tpu.memory_space<vmem>>, vector<32x64xbf16>
    %92 = arith.truncf %90 : vector<64x256xf32> to vector<64x256xbf16>
    %cst_30 = arith.constant dense<0.000000e+00> : vector<32x256xf32>
    %93 = tpu.matmul %91, %92, %cst_30 {dimension_numbers = #tpu.dot_dimension_numbers<[1], [0], [0], [1], [0, 0, 1, 1], [], []>} : vector<32x64xbf16>, vector<64x256xbf16>, vector<32x256xf32> -> vector<32x256xf32>
    %c0_31 = arith.constant 0 : index
    %c0_32 = arith.constant 0 : index
    %94 = vector.load %arg8[%c0_31, %c0_32] : memref<1x1xf32, #tpu.memory_space<vmem>>, vector<1x1xf32>
    %95 = vector.extract_strided_slice %93 {offsets = [0, 0], sizes = [16, 256], strides = [1, 1]} : vector<32x256xf32> to vector<16x256xf32>
    %96 = vector.broadcast %94 : vector<1x1xf32> to vector<16x256xf32>
    %97 = arith.addf %95, %96 : vector<16x256xf32>
    %98 = vector.extract_strided_slice %93 {offsets = [16, 0], sizes = [16, 256], strides = [1, 1]} : vector<32x256xf32> to vector<16x256xf32>
    %99 = vector.broadcast %94 : vector<1x1xf32> to vector<16x256xf32>
    %100 = arith.addf %98, %99 : vector<16x256xf32>
    %101 = arith.addf %97, %100 : vector<16x256xf32>
    %102 = arith.mulf %97, %100 : vector<16x256xf32>
    %103 = arith.addf %101, %102 : vector<16x256xf32>
    %c0_33 = arith.constant 0 : index
    %c0_34 = arith.constant 0 : index
    %c0_35 = arith.constant 0 : index
    %104 = vector.load %arg9[%c0_33, %c0_34, %c0_35] : memref<1x16x256xf32, #tpu.memory_space<vmem>>, vector<1x16x256xf32>
    %105 = vector.shape_cast %104 : vector<1x16x256xf32> to vector<16x256xf32>
    %106 = vector.shape_cast %103 : vector<16x256xf32> to vector<1x16x256xf32>
    tpu.vector_store %arg9[%c0_33, %c0_34, %c0_35], %106 {strides = array<i32>} : memref<1x16x256xf32, #tpu.memory_space<vmem>>, vector<1x16x256xf32>,
    return
  }
  func.func @transform_0(%arg0: i32) -> (i32, i32, i32) {
    %c0_i32 = arith.constant 0 : i32
    %c0_i32_0 = arith.constant 0 : i32
    %c0_i32_1 = arith.constant 0 : i32
    return %arg0, %c0_i32, %c0_i32_0 : i32, i32, i32
  }
  func.func @transform_1(%arg0: i32) -> (i32, i32, i32) {
    %c0_i32 = arith.constant 0 : i32
    %c0_i32_0 = arith.constant 0 : i32
    %c0_i32_1 = arith.constant 0 : i32
    return %arg0, %c0_i32, %c0_i32_0 : i32, i32, i32
  }
  func.func @transform_2(%arg0: i32) -> (i32, i32, i32) {
    %c0_i32 = arith.constant 0 : i32
    %c0_i32_0 = arith.constant 0 : i32
    %c0_i32_1 = arith.constant 0 : i32
    return %arg0, %c0_i32, %c0_i32_0 : i32, i32, i32
  }
  func.func @transform_3(%arg0: i32) -> (i32, i32, i32) {
    %c0_i32 = arith.constant 0 : i32
    %c0_i32_0 = arith.constant 0 : i32
    %c0_i32_1 = arith.constant 0 : i32
    return %arg0, %c0_i32, %c0_i32_0 : i32, i32, i32
  }
  func.func @transform_4(%arg0: i32) -> (i32, i32) {
    %c0_i32 = arith.constant 0 : i32
    %c0_i32_0 = arith.constant 0 : i32
    %c0_i32_1 = arith.constant 0 : i32
    return %c0_i32, %c0_i32_0 : i32, i32
  }
  func.func @transform_5(%arg0: i32) -> (i32, i32) {
    %c0_i32 = arith.constant 0 : i32
    %c0_i32_0 = arith.constant 0 : i32
    %c0_i32_1 = arith.constant 0 : i32
    return %c0_i32, %c0_i32_0 : i32, i32
  }
  func.func @transform_6(%arg0: i32) -> (i32, i32) {
    %c0_i32 = arith.constant 0 : i32
    %c0_i32_0 = arith.constant 0 : i32
    %c0_i32_1 = arith.constant 0 : i32
    return %c0_i32, %c0_i32_0 : i32, i32
  }
  func.func @transform_7(%arg0: i32) -> (i32, i32) {
    %c0_i32 = arith.constant 0 : i32
    %c0_i32_0 = arith.constant 0 : i32
    %c0_i32_1 = arith.constant 0 : i32
    return %c0_i32, %c0_i32_0 : i32, i32
  }
  func.func @transform_8(%arg0: i32) -> (i32, i32, i32) {
    %c0_i32 = arith.constant 0 : i32
    %c0_i32_0 = arith.constant 0 : i32
    %c0_i32_1 = arith.constant 0 : i32
    return %arg0, %c0_i32, %c0_i32_0 : i32, i32, i32
  }
}

module attributes {stable_mosaic.version = 11 : i64} {
  func.func @kernel(%arg0: i32, %arg1: memref<128x128xf32, #tpu.memory_space<vmem>>, %arg2: memref<128x128xf32, #tpu.memory_space<vmem>>, %arg3: memref<128x128xf32, #tpu.memory_space<vmem>>, %arg4: memref<128x128xf32, #tpu.memory_space<vmem>>, %arg5: memref<128x128xf32, #tpu.memory_space<vmem>>, %arg6: memref<1x1xf32, #tpu.memory_space<vmem>>, %arg7: memref<1x1xf32, #tpu.memory_space<vmem>>, %arg8: memref<1x1xf32, #tpu.memory_space<vmem>>, %arg9: memref<1x1xf32, #tpu.memory_space<vmem>>, %arg10: memref<1x1xf32, #tpu.memory_space<vmem>>, %arg11: memref<1x1xf32, #tpu.memory_space<vmem>>, %arg12: memref<1x1xf32, #tpu.memory_space<vmem>>) attributes {dimension_semantics = [#tpu.dimension_semantics<arbitrary>], iteration_bounds = array<i64: 2>, scalar_prefetch = 0 : i64, scratch_operands = 5 : i64, tpu.core_type = #tpu.core_type<tc>, window_params = [{transform_indices = @transform_0, window_bounds = array<i64: 128, 128>}, {transform_indices = @transform_1, window_bounds = array<i64: 128, 128>}, {transform_indices = @transform_2, window_bounds = array<i64: 128, 128>}, {transform_indices = @transform_3, window_bounds = array<i64: 128, 128>}, {transform_indices = @transform_4, window_bounds = array<i64: 128, 128>}, {pipeline_mode = #tpu.pipeline_mode<synchronous>, transform_indices = @transform_5, window_bounds = array<i64: 1, 1>}, {pipeline_mode = #tpu.pipeline_mode<synchronous>, transform_indices = @transform_6, window_bounds = array<i64: 1, 1>}]} {
    %c0_i32 = arith.constant 0 : i32
    %0 = arith.cmpi eq, %arg0, %c0_i32 : i32
    %1 = arith.extui %0 : i1 to i32
    %c0_i32_0 = arith.constant 0 : i32
    %2 = arith.cmpi ne, %1, %c0_i32_0 : i32
    scf.if %2 {
      %cst_46 = arith.constant 0.000000e+00 : f32
      %75 = vector.broadcast %cst_46 : f32 to vector<1x1xf32>
      %c0_47 = arith.constant 0 : index
      %c0_48 = arith.constant 0 : index
      %76 = vector.load %arg8[%c0_47, %c0_48] : memref<1x1xf32, #tpu.memory_space<vmem>>, vector<1x1xf32>
      tpu.vector_store %arg8[%c0_47, %c0_48], %75 {strides = array<i32>} : memref<1x1xf32, #tpu.memory_space<vmem>>, vector<1x1xf32>,
      %cst_49 = arith.constant 0.000000e+00 : f32
      %77 = vector.broadcast %cst_49 : f32 to vector<1x1xf32>
      %c0_50 = arith.constant 0 : index
      %c0_51 = arith.constant 0 : index
      %78 = vector.load %arg9[%c0_50, %c0_51] : memref<1x1xf32, #tpu.memory_space<vmem>>, vector<1x1xf32>
      tpu.vector_store %arg9[%c0_50, %c0_51], %77 {strides = array<i32>} : memref<1x1xf32, #tpu.memory_space<vmem>>, vector<1x1xf32>,
      %cst_52 = arith.constant 0.000000e+00 : f32
      %79 = vector.broadcast %cst_52 : f32 to vector<1x1xf32>
      %c0_53 = arith.constant 0 : index
      %c0_54 = arith.constant 0 : index
      %80 = vector.load %arg10[%c0_53, %c0_54] : memref<1x1xf32, #tpu.memory_space<vmem>>, vector<1x1xf32>
      tpu.vector_store %arg10[%c0_53, %c0_54], %79 {strides = array<i32>} : memref<1x1xf32, #tpu.memory_space<vmem>>, vector<1x1xf32>,
      %cst_55 = arith.constant 0.000000e+00 : f32
      %81 = vector.broadcast %cst_55 : f32 to vector<1x1xf32>
      %c0_56 = arith.constant 0 : index
      %c0_57 = arith.constant 0 : index
      %82 = vector.load %arg11[%c0_56, %c0_57] : memref<1x1xf32, #tpu.memory_space<vmem>>, vector<1x1xf32>
      tpu.vector_store %arg11[%c0_56, %c0_57], %81 {strides = array<i32>} : memref<1x1xf32, #tpu.memory_space<vmem>>, vector<1x1xf32>,
      %cst_58 = arith.constant 0.000000e+00 : f32
      %83 = vector.broadcast %cst_58 : f32 to vector<1x1xf32>
      %c0_59 = arith.constant 0 : index
      %c0_60 = arith.constant 0 : index
      %84 = vector.load %arg12[%c0_59, %c0_60] : memref<1x1xf32, #tpu.memory_space<vmem>>, vector<1x1xf32>
      tpu.vector_store %arg12[%c0_59, %c0_60], %83 {strides = array<i32>} : memref<1x1xf32, #tpu.memory_space<vmem>>, vector<1x1xf32>,
      %cst_61 = arith.constant 0.000000e+00 : f32
      %85 = vector.broadcast %cst_61 : f32 to vector<1x1xf32>
      %c0_62 = arith.constant 0 : index
      %c0_63 = arith.constant 0 : index
      %86 = vector.load %arg6[%c0_62, %c0_63] : memref<1x1xf32, #tpu.memory_space<vmem>>, vector<1x1xf32>
      tpu.vector_store %arg6[%c0_62, %c0_63], %85 {strides = array<i32>} : memref<1x1xf32, #tpu.memory_space<vmem>>, vector<1x1xf32>,
      %cst_64 = arith.constant 0.000000e+00 : f32
      %87 = vector.broadcast %cst_64 : f32 to vector<1x1xf32>
      %c0_65 = arith.constant 0 : index
      %c0_66 = arith.constant 0 : index
      %88 = vector.load %arg7[%c0_65, %c0_66] : memref<1x1xf32, #tpu.memory_space<vmem>>, vector<1x1xf32>
      tpu.vector_store %arg7[%c0_65, %c0_66], %87 {strides = array<i32>} : memref<1x1xf32, #tpu.memory_space<vmem>>, vector<1x1xf32>,
    } else {
    }
    %c0 = arith.constant 0 : index
    %c0_1 = arith.constant 0 : index
    %3 = vector.load %arg1[%c0, %c0_1] : memref<128x128xf32, #tpu.memory_space<vmem>>, vector<128x128xf32>
    %cst = arith.constant 0.00392156886 : f32
    %4 = vector.broadcast %cst : f32 to vector<128x128xf32>
    %5 = arith.mulf %3, %4 : vector<128x128xf32>
    %c0_2 = arith.constant 0 : index
    %c0_3 = arith.constant 0 : index
    %6 = vector.load %arg2[%c0_2, %c0_3] : memref<128x128xf32, #tpu.memory_space<vmem>>, vector<128x128xf32>
    %cst_4 = arith.constant 0.00392156886 : f32
    %7 = vector.broadcast %cst_4 : f32 to vector<128x128xf32>
    %8 = arith.mulf %6, %7 : vector<128x128xf32>
    %cst_5 = arith.constant 5.000000e-01 : f32
    %9 = vector.broadcast %cst_5 : f32 to vector<128x128xf32>
    %10 = arith.cmpf oge, %5, %9 : vector<128x128xf32>
    %cst_6 = arith.constant 1.000000e+00 : f32
    %cst_7 = arith.constant 0.000000e+00 : f32
    %11 = vector.broadcast %cst_6 : f32 to vector<128x128xf32>
    %12 = vector.broadcast %cst_7 : f32 to vector<128x128xf32>
    %13 = arith.select %10, %11, %12 : vector<128x128xi1>, vector<128x128xf32>
    %cst_8 = arith.constant 5.000000e-01 : f32
    %14 = vector.broadcast %cst_8 : f32 to vector<128x128xf32>
    %15 = arith.cmpf oge, %8, %14 : vector<128x128xf32>
    %cst_9 = arith.constant 1.000000e+00 : f32
    %cst_10 = arith.constant 0.000000e+00 : f32
    %16 = vector.broadcast %cst_9 : f32 to vector<128x128xf32>
    %17 = vector.broadcast %cst_10 : f32 to vector<128x128xf32>
    %18 = arith.select %15, %16, %17 : vector<128x128xi1>, vector<128x128xf32>
    %c0_11 = arith.constant 0 : index
    %c0_12 = arith.constant 0 : index
    %19 = vector.load %arg8[%c0_11, %c0_12] : memref<1x1xf32, #tpu.memory_space<vmem>>, vector<1x1xf32>
    %20 = arith.mulf %13, %18 : vector<128x128xf32>
    %21 = vector.shape_cast %20 : vector<128x128xf32> to vector<1x128x128xf32>
    %cst_13 = arith.constant dense<0.000000e+00> : vector<1xf32>
    %22 = vector.multi_reduction <add>, %21, %cst_13 [1, 2] : vector<1x128x128xf32> to vector<1xf32>
    %23 = vector.shape_cast %22 : vector<1xf32> to vector<1x1x1xf32>
    %24 = vector.extract %23[0, 0, 0] : f32 from vector<1x1x1xf32>
    %25 = vector.broadcast %24 : f32 to vector<1x1xf32>
    %26 = arith.addf %19, %25 : vector<1x1xf32>
    %c0_14 = arith.constant 0 : index
    %c0_15 = arith.constant 0 : index
    %27 = vector.load %arg8[%c0_14, %c0_15] : memref<1x1xf32, #tpu.memory_space<vmem>>, vector<1x1xf32>
    tpu.vector_store %arg8[%c0_14, %c0_15], %26 {strides = array<i32>} : memref<1x1xf32, #tpu.memory_space<vmem>>, vector<1x1xf32>,
    %c0_16 = arith.constant 0 : index
    %c0_17 = arith.constant 0 : index
    %28 = vector.load %arg9[%c0_16, %c0_17] : memref<1x1xf32, #tpu.memory_space<vmem>>, vector<1x1xf32>
    %29 = arith.addf %13, %18 : vector<128x128xf32>
    %cst_18 = arith.constant 1.000000e+00 : f32
    %30 = vector.broadcast %cst_18 : f32 to vector<128x128xf32>
    %31 = arith.cmpf oge, %29, %30 : vector<128x128xf32>
    %cst_19 = arith.constant 1.000000e+00 : f32
    %cst_20 = arith.constant 0.000000e+00 : f32
    %32 = vector.broadcast %cst_19 : f32 to vector<128x128xf32>
    %33 = vector.broadcast %cst_20 : f32 to vector<128x128xf32>
    %34 = arith.select %31, %32, %33 : vector<128x128xi1>, vector<128x128xf32>
    %35 = vector.shape_cast %34 : vector<128x128xf32> to vector<1x128x128xf32>
    %cst_21 = arith.constant dense<0.000000e+00> : vector<1xf32>
    %36 = vector.multi_reduction <add>, %35, %cst_21 [1, 2] : vector<1x128x128xf32> to vector<1xf32>
    %37 = vector.shape_cast %36 : vector<1xf32> to vector<1x1x1xf32>
    %38 = vector.extract %37[0, 0, 0] : f32 from vector<1x1x1xf32>
    %39 = vector.broadcast %38 : f32 to vector<1x1xf32>
    %40 = arith.addf %28, %39 : vector<1x1xf32>
    %c0_22 = arith.constant 0 : index
    %c0_23 = arith.constant 0 : index
    %41 = vector.load %arg9[%c0_22, %c0_23] : memref<1x1xf32, #tpu.memory_space<vmem>>, vector<1x1xf32>
    tpu.vector_store %arg9[%c0_22, %c0_23], %40 {strides = array<i32>} : memref<1x1xf32, #tpu.memory_space<vmem>>, vector<1x1xf32>,
    %c0_24 = arith.constant 0 : index
    %c0_25 = arith.constant 0 : index
    %42 = vector.load %arg3[%c0_24, %c0_25] : memref<128x128xf32, #tpu.memory_space<vmem>>, vector<128x128xf32>
    %c0_26 = arith.constant 0 : index
    %c0_27 = arith.constant 0 : index
    %43 = vector.load %arg10[%c0_26, %c0_27] : memref<1x1xf32, #tpu.memory_space<vmem>>, vector<1x1xf32>
    %44 = vector.shape_cast %42 : vector<128x128xf32> to vector<1x128x128xf32>
    %cst_28 = arith.constant dense<0.000000e+00> : vector<1xf32>
    %45 = vector.multi_reduction <add>, %44, %cst_28 [1, 2] : vector<1x128x128xf32> to vector<1xf32>
    %46 = vector.shape_cast %45 : vector<1xf32> to vector<1x1x1xf32>
    %47 = vector.extract %46[0, 0, 0] : f32 from vector<1x1x1xf32>
    %48 = vector.broadcast %47 : f32 to vector<1x1xf32>
    %49 = arith.addf %43, %48 : vector<1x1xf32>
    %c0_29 = arith.constant 0 : index
    %c0_30 = arith.constant 0 : index
    %50 = vector.load %arg10[%c0_29, %c0_30] : memref<1x1xf32, #tpu.memory_space<vmem>>, vector<1x1xf32>
    tpu.vector_store %arg10[%c0_29, %c0_30], %49 {strides = array<i32>} : memref<1x1xf32, #tpu.memory_space<vmem>>, vector<1x1xf32>,
    %c0_31 = arith.constant 0 : index
    %c0_32 = arith.constant 0 : index
    %51 = vector.load %arg11[%c0_31, %c0_32] : memref<1x1xf32, #tpu.memory_space<vmem>>, vector<1x1xf32>
    %52 = arith.mulf %42, %42 : vector<128x128xf32>
    %53 = vector.shape_cast %52 : vector<128x128xf32> to vector<1x128x128xf32>
    %cst_33 = arith.constant dense<0.000000e+00> : vector<1xf32>
    %54 = vector.multi_reduction <add>, %53, %cst_33 [1, 2] : vector<1x128x128xf32> to vector<1xf32>
    %55 = vector.shape_cast %54 : vector<1xf32> to vector<1x1x1xf32>
    %56 = vector.extract %55[0, 0, 0] : f32 from vector<1x1x1xf32>
    %57 = vector.broadcast %56 : f32 to vector<1x1xf32>
    %58 = arith.addf %51, %57 : vector<1x1xf32>
    %c0_34 = arith.constant 0 : index
    %c0_35 = arith.constant 0 : index
    %59 = vector.load %arg11[%c0_34, %c0_35] : memref<1x1xf32, #tpu.memory_space<vmem>>, vector<1x1xf32>
    tpu.vector_store %arg11[%c0_34, %c0_35], %58 {strides = array<i32>} : memref<1x1xf32, #tpu.memory_space<vmem>>, vector<1x1xf32>,
    %c0_36 = arith.constant 0 : index
    %c0_37 = arith.constant 0 : index
    %60 = vector.load %arg4[%c0_36, %c0_37] : memref<128x128xf32, #tpu.memory_space<vmem>>, vector<128x128xf32>
    %c0_38 = arith.constant 0 : index
    %c0_39 = arith.constant 0 : index
    %61 = vector.load %arg5[%c0_38, %c0_39] : memref<128x128xf32, #tpu.memory_space<vmem>>, vector<128x128xf32>
    %62 = arith.subf %60, %61 : vector<128x128xf32>
    %c0_40 = arith.constant 0 : index
    %c0_41 = arith.constant 0 : index
    %63 = vector.load %arg12[%c0_40, %c0_41] : memref<1x1xf32, #tpu.memory_space<vmem>>, vector<1x1xf32>
    %64 = arith.mulf %62, %62 : vector<128x128xf32>
    %65 = vector.shape_cast %64 : vector<128x128xf32> to vector<1x128x128xf32>
    %cst_42 = arith.constant dense<0.000000e+00> : vector<1xf32>
    %66 = vector.multi_reduction <add>, %65, %cst_42 [1, 2] : vector<1x128x128xf32> to vector<1xf32>
    %67 = vector.shape_cast %66 : vector<1xf32> to vector<1x1x1xf32>
    %68 = vector.extract %67[0, 0, 0] : f32 from vector<1x1x1xf32>
    %69 = vector.broadcast %68 : f32 to vector<1x1xf32>
    %70 = arith.addf %63, %69 : vector<1x1xf32>
    %c0_43 = arith.constant 0 : index
    %c0_44 = arith.constant 0 : index
    %71 = vector.load %arg12[%c0_43, %c0_44] : memref<1x1xf32, #tpu.memory_space<vmem>>, vector<1x1xf32>
    tpu.vector_store %arg12[%c0_43, %c0_44], %70 {strides = array<i32>} : memref<1x1xf32, #tpu.memory_space<vmem>>, vector<1x1xf32>,
    %c1_i32 = arith.constant 1 : i32
    %72 = arith.cmpi eq, %arg0, %c1_i32 : i32
    %73 = arith.extui %72 : i1 to i32
    %c0_i32_45 = arith.constant 0 : i32
    %74 = arith.cmpi ne, %73, %c0_i32_45 : i32
    scf.if %74 {
      %c0_46 = arith.constant 0 : index
      %c0_47 = arith.constant 0 : index
      %75 = vector.load %arg8[%c0_46, %c0_47] : memref<1x1xf32, #tpu.memory_space<vmem>>, vector<1x1xf32>
      %c0_48 = arith.constant 0 : index
      %c0_49 = arith.constant 0 : index
      %76 = vector.load %arg9[%c0_48, %c0_49] : memref<1x1xf32, #tpu.memory_space<vmem>>, vector<1x1xf32>
      %cst_50 = arith.constant 1.000000e-07 : f32
      %77 = vector.broadcast %cst_50 : f32 to vector<1x1xf32>
      %78 = arith.addf %77, %76 : vector<1x1xf32>
      %79 = arith.divf %75, %78 : vector<1x1xf32>
      %c0_51 = arith.constant 0 : index
      %c0_52 = arith.constant 0 : index
      %80 = vector.load %arg11[%c0_51, %c0_52] : memref<1x1xf32, #tpu.memory_space<vmem>>, vector<1x1xf32>
      %cst_53 = arith.constant 2.000000e+00 : f32
      %81 = vector.broadcast %cst_53 : f32 to vector<1x1xf32>
      %82 = arith.mulf %81, %79 : vector<1x1xf32>
      %c0_54 = arith.constant 0 : index
      %c0_55 = arith.constant 0 : index
      %83 = vector.load %arg10[%c0_54, %c0_55] : memref<1x1xf32, #tpu.memory_space<vmem>>, vector<1x1xf32>
      %84 = arith.mulf %82, %83 : vector<1x1xf32>
      %85 = arith.subf %80, %84 : vector<1x1xf32>
      %cst_56 = arith.constant 3.276800e+04 : f32
      %86 = vector.broadcast %cst_56 : f32 to vector<1x1xf32>
      %87 = arith.mulf %86, %79 : vector<1x1xf32>
      %88 = arith.mulf %87, %79 : vector<1x1xf32>
      %89 = arith.addf %85, %88 : vector<1x1xf32>
      %cst_57 = arith.constant 3.05175781E-5 : f32
      %90 = vector.broadcast %cst_57 : f32 to vector<1x1xf32>
      %91 = arith.mulf %89, %90 : vector<1x1xf32>
      %c0_58 = arith.constant 0 : index
      %c0_59 = arith.constant 0 : index
      %92 = vector.load %arg7[%c0_58, %c0_59] : memref<1x1xf32, #tpu.memory_space<vmem>>, vector<1x1xf32>
      tpu.vector_store %arg7[%c0_58, %c0_59], %91 {strides = array<i32>} : memref<1x1xf32, #tpu.memory_space<vmem>>, vector<1x1xf32>,
      %c0_60 = arith.constant 0 : index
      %c0_61 = arith.constant 0 : index
      %93 = vector.load %arg12[%c0_60, %c0_61] : memref<1x1xf32, #tpu.memory_space<vmem>>, vector<1x1xf32>
      %cst_62 = arith.constant 3.05175781E-5 : f32
      %94 = vector.broadcast %cst_62 : f32 to vector<1x1xf32>
      %95 = arith.mulf %93, %94 : vector<1x1xf32>
      %c0_63 = arith.constant 0 : index
      %c0_64 = arith.constant 0 : index
      %96 = vector.load %arg6[%c0_63, %c0_64] : memref<1x1xf32, #tpu.memory_space<vmem>>, vector<1x1xf32>
      tpu.vector_store %arg6[%c0_63, %c0_64], %95 {strides = array<i32>} : memref<1x1xf32, #tpu.memory_space<vmem>>, vector<1x1xf32>,
    } else {
    }
    return
  }
  func.func @transform_0(%arg0: i32) -> (i32, i32) {
    %c0_i32 = arith.constant 0 : i32
    %c0_i32_0 = arith.constant 0 : i32
    return %arg0, %c0_i32 : i32, i32
  }
  func.func @transform_1(%arg0: i32) -> (i32, i32) {
    %c0_i32 = arith.constant 0 : i32
    %c0_i32_0 = arith.constant 0 : i32
    return %arg0, %c0_i32 : i32, i32
  }
  func.func @transform_2(%arg0: i32) -> (i32, i32) {
    %c0_i32 = arith.constant 0 : i32
    %c0_i32_0 = arith.constant 0 : i32
    return %arg0, %c0_i32 : i32, i32
  }
  func.func @transform_3(%arg0: i32) -> (i32, i32) {
    %c0_i32 = arith.constant 0 : i32
    %c0_i32_0 = arith.constant 0 : i32
    return %arg0, %c0_i32 : i32, i32
  }
  func.func @transform_4(%arg0: i32) -> (i32, i32) {
    %c0_i32 = arith.constant 0 : i32
    %c0_i32_0 = arith.constant 0 : i32
    return %arg0, %c0_i32 : i32, i32
  }
  func.func @transform_5(%arg0: i32) -> (i32, i32) {
    %c0_i32 = arith.constant 0 : i32
    %c0_i32_0 = arith.constant 0 : i32
    %c0_i32_1 = arith.constant 0 : i32
    return %c0_i32, %c0_i32_0 : i32, i32
  }
  func.func @transform_6(%arg0: i32) -> (i32, i32) {
    %c0_i32 = arith.constant 0 : i32
    %c0_i32_0 = arith.constant 0 : i32
    %c0_i32_1 = arith.constant 0 : i32
    return %c0_i32, %c0_i32_0 : i32, i32
  }
}

</mosaic_0001>

<llo_original>
// kernel: build_model_kd_forward.2
$region0: #{build_model_kd_forward.2}
  #allocation0 [shape = 'u32[]', space=smem, size = 0x4, offset = 0x4, fixed_abs, tag = 'smem constant byte address 0x4 - core index']
  #allocation1 [shape = 'u32[144,128]{1,0:T(1,128)}', space=vmem, size = 0x12000, scoped, tag = 'internal scratch']
  #allocation2 [shape = 'f32[1,1]{1,0:T(1,128)S(1)}', space=vmem, size = 0x200, scoped, tag = 'scoped memory for build_model_kd_forward.2']
  %s0 = inlined_call_operand.vmem [shape: f32[2,32,256], index: 0, kind: input, shape index: {}]
  %s1 = inlined_call_operand.vmem [shape: f32[2,32,64], index: 1, kind: input, shape index: {}]
  %s2 = inlined_call_operand.vmem [shape: f32[2,32,16], index: 2, kind: input, shape index: {}]
  %s3 = inlined_call_operand.vmem [shape: f32[2,32,6], index: 3, kind: input, shape index: {}]
  %s4 = inlined_call_operand.vmem [shape: bf16[64,256], index: 4, kind: input, shape index: {}]
  %s5 = inlined_call_operand.vmem [shape: bf16[16,256], index: 5, kind: input, shape index: {}]
  %s6 = inlined_call_operand.vmem [shape: bf16[32,64], index: 6, kind: input, shape index: {}]
  %s7 = inlined_call_operand.<no memory space> [shape: f32[1,1], index: 7, kind: input, shape index: {}]
  %s8 = inlined_call_operand.vmem [shape: f32[2,16,256], index: 8, kind: output, shape index: {}]
  %s9 = sld [smem:[#allocation0]]
  $region65: #{build_model_kd_forward.2} parent=0
    _
  %s11 = ssub.s32 1, %s9
  %s12 = scalar_select 0, %s11, %s9
  %v13 = vstv %s7
  %14 = vst [vmem:[#allocation2] sm:$0x1] %v13
  loop: start=0, step=1, limit=4
  $region2: #{build_model_kd_forward.2} parent=0 // loop_pre_header
    _
  $region3: #{build_model_kd_forward.2} parent=0 // loop_header
    %s16 = sphi 0, %s20
    %p17 = scmp.ge.s32.totalorder %s16, 4
    %s26 = sphi 0, %s28
    %s29 = sphi 0, %s26
    %s30 = sphi 0, %s29
    %s46 = sphi 0, %s30
    %s52 = sphi 0, %s54
    %s55 = sphi 0, %s52
    %s56 = sphi 0, %s55
    %s72 = sphi 0, %s56
    %s78 = sphi 0, %s80
    %s81 = sphi 0, %s78
    %s82 = sphi 0, %s81
    %s98 = sphi 0, %s82
    %s104 = sphi 0, %s106
    %s107 = sphi 0, %s104
    %s108 = sphi 0, %s107
    %s124 = sphi 0, %s108
    %s128 = sphi 0, %s128
    %s130 = sphi 0, %s128
    %s131 = sphi 0, %s130
    %s145 = sphi 0, %s131
    %s149 = sphi 0, %s149
    %s151 = sphi 0, %s149
    %s152 = sphi 0, %s151
    %s166 = sphi 0, %s152
    %s170 = sphi 0, %s170
    %s172 = sphi 0, %s170
    %s173 = sphi 0, %s172
    %s187 = sphi 0, %s173
    %s191 = sphi 0, %s191
    %s193 = sphi 0, %s191
    %s194 = sphi 0, %s193
    %s208 = sphi 0, %s194
    %s214 = sphi 0, %s216
    %s217 = sphi 0, %s214
    %s218 = sphi 0, %s217
    %s234 = sphi 0, %s218
  $region4: #{build_model_kd_forward.2} parent=0 // loop_header_branch
    %19 = sbr.rel (%p17) target = $region8
  $region5: #{build_model_kd_forward.2} parent=0 // loop_body
    %s21 = ssub.s32 %s16, 1
    %s22 = ssub.s32 %s16, 2
    %s23 = sadd.s32 %s16, 1
    %s24 = ssub.s32 %s16, %s23
    %p25 = scmp.eq.s32.totalorder %s24, 0
    %s27 = sadd.s32 %s26, 1
    %s28 = scalar_select %p25, %s26, %s27
    %p31 = pneg %p25
    %p32 = scmp.eq.s32.totalorder %s16, 1
    %p33 = por %p31, %p32
    %p34 = scmp.ne.s32.totalorder %s26, %s29
    %p35 = scmp.eq.s32.totalorder %s16, 0
    %p36 = por %p34, %p35
    %p37 = scmp.ne.s32.totalorder %s26, %s29
    %p38 = scmp.eq.s32.totalorder %s21, 1
    %p39 = por %p37, %p38
    %p40 = scmp.ne.s32.totalorder %s29, %s30
    %p41 = scmp.eq.s32.totalorder %s21, 0
    %p42 = por %p40, %p41
    %p43 = scmp.ne.s32.totalorder %s29, %s30
    %p44 = scmp.eq.s32.totalorder %s22, 1
    %p45 = por %p43, %p44
    %p47 = scmp.ne.s32.totalorder %s30, %s46
    %p48 = scmp.eq.s32.totalorder %s22, 0
    %p49 = por %p47, %p48
    %s50 = ssub.s32 %s16, %s23
    %p51 = scmp.eq.s32.totalorder %s50, 0
    %s53 = sadd.s32 %s52, 1
    %s54 = scalar_select %p51, %s52, %s53
    %p57 = pneg %p51
    %p58 = scmp.eq.s32.totalorder %s16, 1
    %p59 = por %p57, %p58
    %p60 = scmp.ne.s32.totalorder %s52, %s55
    %p61 = scmp.eq.s32.totalorder %s16, 0
    %p62 = por %p60, %p61
    %p63 = scmp.ne.s32.totalorder %s52, %s55
    %p64 = scmp.eq.s32.totalorder %s21, 1
    %p65 = por %p63, %p64
    %p66 = scmp.ne.s32.totalorder %s55, %s56
    %p67 = scmp.eq.s32.totalorder %s21, 0
    %p68 = por %p66, %p67
    %p69 = scmp.ne.s32.totalorder %s55, %s56
    %p70 = scmp.eq.s32.totalorder %s22, 1
    %p71 = por %p69, %p70
    %p73 = scmp.ne.s32.totalorder %s56, %s72
    %p74 = scmp.eq.s32.totalorder %s22, 0
    %p75 = por %p73, %p74
    %s76 = ssub.s32 %s16, %s23
    %p77 = scmp.eq.s32.totalorder %s76, 0
    %s79 = sadd.s32 %s78, 1
    %s80 = scalar_select %p77, %s78, %s79
    %p83 = pneg %p77
    %p84 = scmp.eq.s32.totalorder %s16, 1
    %p85 = por %p83, %p84
    %p86 = scmp.ne.s32.totalorder %s78, %s81
    %p87 = scmp.eq.s32.totalorder %s16, 0
    %p88 = por %p86, %p87
    %p89 = scmp.ne.s32.totalorder %s78, %s81
    %p90 = scmp.eq.s32.totalorder %s21, 1
    %p91 = por %p89, %p90
    %p92 = scmp.ne.s32.totalorder %s81, %s82
    %p93 = scmp.eq.s32.totalorder %s21, 0
    %p94 = por %p92, %p93
    %p95 = scmp.ne.s32.totalorder %s81, %s82
    %p96 = scmp.eq.s32.totalorder %s22, 1
    %p97 = por %p95, %p96
    %p99 = scmp.ne.s32.totalorder %s82, %s98
    %p100 = scmp.eq.s32.totalorder %s22, 0
    %p101 = por %p99, %p100
    %s102 = ssub.s32 %s16, %s23
    %p103 = scmp.eq.s32.totalorder %s102, 0
    %s105 = sadd.s32 %s104, 1
    %s106 = scalar_select %p103, %s104, %s105
    %p109 = pneg %p103
    %p110 = scmp.eq.s32.totalorder %s16, 1
    %p111 = por %p109, %p110
    %p112 = scmp.ne.s32.totalorder %s104, %s107
    %p113 = scmp.eq.s32.totalorder %s16, 0
    %p114 = por %p112, %p113
    %p115 = scmp.ne.s32.totalorder %s104, %s107
    %p116 = scmp.eq.s32.totalorder %s21, 1
    %p117 = por %p115, %p116
    %p118 = scmp.ne.s32.totalorder %s107, %s108
    %p119 = scmp.eq.s32.totalorder %s21, 0
    %p120 = por %p118, %p119
    %p121 = scmp.ne.s32.totalorder %s107, %s108
    %p122 = scmp.eq.s32.totalorder %s22, 1
    %p123 = por %p121, %p122
    %p125 = scmp.ne.s32.totalorder %s108, %s124
    %p126 = scmp.eq.s32.totalorder %s22, 0
    %p127 = por %p125, %p126
    %s129 = sadd.s32 %s128, 1
    %p132 = scmp.eq.s32.totalorder %s16, 1
    %p133 = scmp.ne.s32.totalorder %s128, %s130
    %p134 = scmp.eq.s32.totalorder %s16, 0
    %p135 = por %p133, %p134
    %p136 = scmp.ne.s32.totalorder %s128, %s130
    %p137 = scmp.eq.s32.totalorder %s21, 1
    %p138 = por %p136, %p137
    %p139 = scmp.ne.s32.totalorder %s130, %s131
    %p140 = scmp.eq.s32.totalorder %s21, 0
    %p141 = por %p139, %p140
    %p142 = scmp.ne.s32.totalorder %s130, %s131
    %p143 = scmp.eq.s32.totalorder %s22, 1
    %p144 = por %p142, %p143
    %p146 = scmp.ne.s32.totalorder %s131, %s145
    %p147 = scmp.eq.s32.totalorder %s22, 0
    %p148 = por %p146, %p147
    %s150 = sadd.s32 %s149, 1
    %p153 = scmp.eq.s32.totalorder %s16, 1
    %p154 = scmp.ne.s32.totalorder %s149, %s151
    %p155 = scmp.eq.s32.totalorder %s16, 0
    %p156 = por %p154, %p155
    %p157 = scmp.ne.s32.totalorder %s149, %s151
    %p158 = scmp.eq.s32.totalorder %s21, 1
    %p159 = por %p157, %p158
    %p160 = scmp.ne.s32.totalorder %s151, %s152
    %p161 = scmp.eq.s32.totalorder %s21, 0
    %p162 = por %p160, %p161
    %p163 = scmp.ne.s32.totalorder %s151, %s152
    %p164 = scmp.eq.s32.totalorder %s22, 1
    %p165 = por %p163, %p164
    %p167 = scmp.ne.s32.totalorder %s152, %s166
    %p168 = scmp.eq.s32.totalorder %s22, 0
    %p169 = por %p167, %p168
    %s171 = sadd.s32 %s170, 1
    %p174 = scmp.eq.s32.totalorder %s16, 1
    %p175 = scmp.ne.s32.totalorder %s170, %s172
    %p176 = scmp.eq.s32.totalorder %s16, 0
    %p177 = por %p175, %p176
    %p178 = scmp.ne.s32.totalorder %s170, %s172
    %p179 = scmp.eq.s32.totalorder %s21, 1
    %p180 = por %p178, %p179
    %p181 = scmp.ne.s32.totalorder %s172, %s173
    %p182 = scmp.eq.s32.totalorder %s21, 0
    %p183 = por %p181, %p182
    %p184 = scmp.ne.s32.totalorder %s172, %s173
    %p185 = scmp.eq.s32.totalorder %s22, 1
    %p186 = por %p184, %p185
    %p188 = scmp.ne.s32.totalorder %s173, %s187
    %p189 = scmp.eq.s32.totalorder %s22, 0
    %p190 = por %p188, %p189
    %s192 = sadd.s32 %s191, 1
    %p195 = scmp.eq.s32.totalorder %s16, 1
    %p196 = scmp.ne.s32.totalorder %s191, %s193
    %p197 = scmp.eq.s32.totalorder %s16, 0
    %p198 = por %p196, %p197
    %p199 = scmp.ne.s32.totalorder %s191, %s193
    %p200 = scmp.eq.s32.totalorder %s21, 1
    %p201 = por %p199, %p200
    %p202 = scmp.ne.s32.totalorder %s193, %s194
    %p203 = scmp.eq.s32.totalorder %s21, 0
    %p204 = por %p202, %p203
    %p205 = scmp.ne.s32.totalorder %s193, %s194
    %p206 = scmp.eq.s32.totalorder %s22, 1
    %p207 = por %p205, %p206
    %p209 = scmp.ne.s32.totalorder %s194, %s208
    %p210 = scmp.eq.s32.totalorder %s22, 0
    %p211 = por %p209, %p210
    %s212 = ssub.s32 %s16, %s23
    %p213 = scmp.eq.s32.totalorder %s212, 0
    %s215 = sadd.s32 %s214, 1
    %s216 = scalar_select %p213, %s214, %s215
    %p219 = pneg %p213
    %p220 = scmp.eq.s32.totalorder %s16, 1
    %p221 = por %p219, %p220
    %p222 = scmp.ne.s32.totalorder %s214, %s217
    %p223 = scmp.eq.s32.totalorder %s16, 0
    %p224 = por %p222, %p223
    %p225 = scmp.ne.s32.totalorder %s214, %s217
    %p226 = scmp.eq.s32.totalorder %s21, 1
    %p227 = por %p225, %p226
    %p228 = scmp.ne.s32.totalorder %s217, %s218
    %p229 = scmp.eq.s32.totalorder %s21, 0
    %p230 = por %p228, %p229
    %p231 = scmp.ne.s32.totalorder %s217, %s218
    %p232 = scmp.eq.s32.totalorder %s22, 1
    %p233 = por %p231, %p232
    %p235 = scmp.ne.s32.totalorder %s218, %s234
    %p236 = scmp.eq.s32.totalorder %s22, 0
    %p237 = por %p235, %p236
    %p238 = scmp.le.s32.totalorder 1, %s16
    %p239 = scmp.lt.s32.totalorder %s16, 3
    %p240 = pnand %p238, %p239
    %p241 = pneg %p240
    // Predicated region
    $region9: #{build_model_kd_forward.2} parent=5 // pred_check
      _
    $region10: #{build_model_kd_forward.2} parent=5 // pred_check_branch
      %243 = sbr.rel (%p240) target = $region12
    $region11: #{build_model_kd_forward.2} parent=5 // pred_region
      %s244 = ssub.s32 %s16, 1
      // Predicated region
      $region13: #{build_model_kd_forward.2} parent=11 // pred_check
        %p245 = pneg %p141
      $region14: #{build_model_kd_forward.2} parent=11 // pred_check_branch
        %247 = sbr.rel (%p245) target = $region16
      $region15: #{build_model_kd_forward.2} parent=11 // pred_region
        _
      $region16: #{build_model_kd_forward.2} parent=11 // pred_fallthru
        _
      // Predicated region
      $region17: #{build_model_kd_forward.2} parent=11 // pred_check
        %p248 = pneg %p162
      $region18: #{build_model_kd_forward.2} parent=11 // pred_check_branch
        %250 = sbr.rel (%p248) target = $region20
      $region19: #{build_model_kd_forward.2} parent=11 // pred_region
        _
      $region20: #{build_model_kd_forward.2} parent=11 // pred_fallthru
        _
      // Predicated region
      $region21: #{build_model_kd_forward.2} parent=11 // pred_check
        %p251 = pneg %p183
      $region22: #{build_model_kd_forward.2} parent=11 // pred_check_branch
        %253 = sbr.rel (%p251) target = $region24
      $region23: #{build_model_kd_forward.2} parent=11 // pred_region
        _
      $region24: #{build_model_kd_forward.2} parent=11 // pred_fallthru
        _
      // Predicated region
      $region25: #{build_model_kd_forward.2} parent=11 // pred_check
        %p254 = pneg %p204
      $region26: #{build_model_kd_forward.2} parent=11 // pred_check_branch
        %256 = sbr.rel (%p254) target = $region28
      $region27: #{build_model_kd_forward.2} parent=11 // pred_region
        _
      $region28: #{build_model_kd_forward.2} parent=11 // pred_fallthru
        _
    $region12: #{build_model_kd_forward.2} parent=5 // pred_fallthru
      _
    %p257 = scmp.lt.s32.totalorder %s16, 2
    // Predicated region
    $region29: #{build_model_kd_forward.2} parent=5 // pred_check
      %p258 = pneg %p257
    $region30: #{build_model_kd_forward.2} parent=5 // pred_check_branch
      %260 = sbr.rel (%p258) target = $region32
    $region31: #{build_model_kd_forward.2} parent=5 // pred_region
      // Predicated region
      $region33: #{build_model_kd_forward.2} parent=31 // pred_check
        %p261 = pneg %p36
      $region34: #{build_model_kd_forward.2} parent=31 // pred_check_branch
        %263 = sbr.rel (%p261) target = $region36
      $region35: #{build_model_kd_forward.2} parent=31 // pred_region
        %p264 = scmp.lt.s32.totalorder %s16, 1
        %s265 = scalar_select %p264, %s16, 1
        %s266 = smul.addr %s265, 8
        %s267 = smul.addr %s266, 8
        %s268 = scalar_lea.vmem %s0, %s267
      $region36: #{build_model_kd_forward.2} parent=31 // pred_fallthru
        _
      // Predicated region
      $region37: #{build_model_kd_forward.2} parent=31 // pred_check
        %p269 = pneg %p62
      $region38: #{build_model_kd_forward.2} parent=31 // pred_check_branch
        %271 = sbr.rel (%p269) target = $region40
      $region39: #{build_model_kd_forward.2} parent=31 // pred_region
        %p272 = scmp.lt.s32.totalorder %s16, 1
        %s273 = scalar_select %p272, %s16, 1
        %s274 = smul.addr %s273, 4
        %s275 = smul.addr %s274, 8
        %s276 = scalar_lea.vmem %s1, %s275
      $region40: #{build_model_kd_forward.2} parent=31 // pred_fallthru
        _
      // Predicated region
      $region41: #{build_model_kd_forward.2} parent=31 // pred_check
        %p277 = pneg %p88
      $region42: #{build_model_kd_forward.2} parent=31 // pred_check_branch
        %279 = sbr.rel (%p277) target = $region44
      $region43: #{build_model_kd_forward.2} parent=31 // pred_region
        %p280 = scmp.lt.s32.totalorder %s16, 1
        %s281 = scalar_select %p280, %s16, 1
        %s282 = smul.addr %s281, 4
        %s283 = smul.addr %s282, 8
        %s284 = scalar_lea.vmem %s2, %s283
      $region44: #{build_model_kd_forward.2} parent=31 // pred_fallthru
        _
      // Predicated region
      $region45: #{build_model_kd_forward.2} parent=31 // pred_check
        %p285 = pneg %p114
      $region46: #{build_model_kd_forward.2} parent=31 // pred_check_branch
        %287 = sbr.rel (%p285) target = $region48
      $region47: #{build_model_kd_forward.2} parent=31 // pred_region
        %p288 = scmp.lt.s32.totalorder %s16, 1
        %s289 = scalar_select %p288, %s16, 1
        %s290 = smul.addr %s289, 4
        %s291 = smul.addr %s290, 8
        %s292 = scalar_lea.vmem %s3, %s291
      $region48: #{build_model_kd_forward.2} parent=31 // pred_fallthru
        _
    $region32: #{build_model_kd_forward.2} parent=5 // pred_fallthru
      _
    %p293 = scmp.le.s32.totalorder 1, %s16
    %p294 = scmp.lt.s32.totalorder %s16, 3
    %p295 = pnand %p293, %p294
    %p296 = pneg %p295
    // Predicated region
    $region49: #{build_model_kd_forward.2} parent=5 // pred_check
      _
    $region50: #{build_model_kd_forward.2} parent=5 // pred_check_branch
      %298 = sbr.rel (%p295) target = $region52
    $region51: #{build_model_kd_forward.2} parent=5 // pred_region
      %s299 = ssub.s32 %s16, 1
      %p300 = scmp.lt.s32.totalorder %s21, 1
      %s301 = scalar_select %p300, %s21, 1
      %s302 = smul.addr %s301, 8
      %s303 = smul.addr %s302, 8
      %s304 = scalar_lea.vmem %s0, %s303
      %p305 = pneg %p42
      %p306 = pneg %p39
      %p307 = scmp.lt.s32.totalorder %s21, 1
      %s308 = scalar_select %p307, %s21, 1
      %s309 = smul.addr %s308, 4
      %s310 = smul.addr %s309, 8
      %s311 = scalar_lea.vmem %s1, %s310
      %p312 = pneg %p68
      %p313 = pneg %p65
      %p314 = scmp.lt.s32.totalorder %s21, 1
      %s315 = scalar_select %p314, %s21, 1
      %s316 = smul.addr %s315, 4
      %s317 = smul.addr %s316, 8
      %s318 = scalar_lea.vmem %s2, %s317
      %p319 = pneg %p94
      %p320 = pneg %p91
      %p321 = scmp.lt.s32.totalorder %s21, 1
      %s322 = scalar_select %p321, %s21, 1
      %s323 = smul.addr %s322, 4
      %s324 = smul.addr %s323, 8
      %s325 = scalar_lea.vmem %s3, %s324
      %p326 = pneg %p120
      %p327 = pneg %p117
      %p328 = pneg %p141
      %p329 = pneg %p138
      %p330 = pneg %p162
      %p331 = pneg %p159
      %p332 = pneg %p183
      %p333 = pneg %p180
      %p334 = pneg %p204
      %p335 = pneg %p201
      %p336 = pneg %p230
      %p337 = pneg %p227
      %p338 = scmp.lt.s32.totalorder %s21, 1
      %s339 = scalar_select %p338, %s21, 1
      %s340 = smul.addr %s339, 4
      %s341 = smul.addr %s340, 8
      %s342 = scalar_lea.vmem %s8, %s341
      %p343 = scmp.lt.s32.totalorder %s21, 1
      %s344 = scalar_select %p343, %s21, 1
      %s345 = smul.addr %s344, 8
      %s346 = smul.addr %s345, 8
      %s347 = scalar_lea.vmem %s0, %s346
      %p348 = scmp.lt.s32.totalorder %s21, 1
      %s349 = scalar_select %p348, %s21, 1
      %s350 = smul.addr %s349, 4
      %s351 = smul.addr %s350, 8
      %s352 = scalar_lea.vmem %s1, %s351
      %p353 = scmp.lt.s32.totalorder %s21, 1
      %s354 = scalar_select %p353, %s21, 1
      %s355 = smul.addr %s354, 4
      %s356 = smul.addr %s355, 8
      %s357 = scalar_lea.vmem %s2, %s356
      %p358 = scmp.lt.s32.totalorder %s21, 1
      %s359 = scalar_select %p358, %s21, 1
      %s360 = smul.addr %s359, 4
      %s361 = smul.addr %s360, 8
      %s362 = scalar_lea.vmem %s3, %s361
      %p363 = scmp.lt.s32.totalorder %s21, 1
      %s364 = scalar_select %p363, %s21, 1
      %s365 = smul.addr %s364, 4
      %s366 = smul.addr %s365, 8
      %s367 = scalar_lea.vmem %s8, %s366
      %v369 = vld [vmem:[%s362] sm:$0xff]
      %v370 = vld [vmem:[%s362 + $0x8] sm:$0xff]
      %v371 = vld [vmem:[%s362 + $0x10] sm:$0xff]
      %v372 = vld [vmem:[%s362 + $0x18] sm:$0xff]
      %v373 = vld [vmem:[%s347] sm:$0xff]
      %v374 = vld [vmem:[%s347 + $0x8] sm:$0xff]
      %v375 = vld [vmem:[%s347 + $0x10] sm:$0xff]
      %v376 = vld [vmem:[%s347 + $0x18] sm:$0xff]
      %v377 = vld [vmem:[%s347 + $0x20] sm:$0xff]
      %v378 = vld [vmem:[%s347 + $0x28] sm:$0xff]
      %v379 = vld [vmem:[%s347 + $0x30] sm:$0xff]
      %v380 = vld [vmem:[%s347 + $0x38] sm:$0xff]
      %v381 = vld [vmem:[%s352] sm:$0xff]
      %v382 = vld [vmem:[%s352 + $0x8] sm:$0xff]
      %v383 = vld [vmem:[%s352 + $0x10] sm:$0xff]
      %v384 = vld [vmem:[%s352 + $0x18] sm:$0xff]
      %v385 = vld [vmem:[%s357] sm:$0xff]
      %v386 = vld [vmem:[%s357 + $0x8] sm:$0xff]
      %v387 = vld [vmem:[%s357 + $0x10] sm:$0xff]
      %v388 = vld [vmem:[%s357 + $0x18] sm:$0xff]
      %390 = vset.pattern.permute.xlu0 0
      %391 = vperm.xlu0 %390, %v369
      %v392 = vpop.permute.xlu0 %391
      %395 = vset.pattern.permute.xlu0 0
      %396 = vperm.xlu0 %395, %v370
      %v397 = vpop.permute.xlu0 %396
      %400 = vset.pattern.permute.xlu0 0
      %401 = vperm.xlu0 %400, %v371
      %v402 = vpop.permute.xlu0 %401
      %405 = vset.pattern.permute.xlu0 0
      %406 = vperm.xlu0 %405, %v372
      %v407 = vpop.permute.xlu0 %406
      %v409 = vmul.f32 %v373, %v392
      %v410 = vmul.f32 %v374, %v392
      %v411 = vmul.f32 %v375, %v397
      %v412 = vmul.f32 %v376, %v397
      %v413 = vmul.f32 %v377, %v402
      %v414 = vmul.f32 %v378, %v402
      %v415 = vmul.f32 %v379, %v407
      %v416 = vmul.f32 %v380, %v407
      %v417 = vmax.f32 %v409, %v413
      %v418 = vmax.f32 %v411, %v415
      %v419 = vmax.f32 %v417, %v418
      %v420 = vrot.slane %v419, 4
      %v421 = vmax.f32 %v419, %v420
      %v422 = vrot.slane %v421, 2
      %v423 = vmax.f32 %v421, %v422
      %v424 = vrot.slane %v423, 1
      %v425 = vmax.f32 %v423, %v424
      %v426 = vmax.f32 %v410, %v414
      %v427 = vmax.f32 %v412, %v416
      %v428 = vmax.f32 %v426, %v427
      %v429 = vrot.slane %v428, 4
      %v430 = vmax.f32 %v428, %v429
      %v431 = vrot.slane %v430, 2
      %v432 = vmax.f32 %v430, %v431
      %v433 = vrot.slane %v432, 1
      %v434 = vmax.f32 %v432, %v433
      %v435 = vsub.f32 %v409, %v425
      %v436 = vsub.f32 %v410, %v434
      %v437 = vsub.f32 %v411, %v425
      %v438 = vsub.f32 %v412, %v434
      %v439 = vsub.f32 %v413, %v425
      %v440 = vsub.f32 %v414, %v434
      %v441 = vsub.f32 %v415, %v425
      %v442 = vsub.f32 %v416, %v434
      %v443 = vmul.f32 %v435, 1.442695
      %v444 = vpow.pop %v443
      %v445 = vmul.f32 %v436, 1.442695
      %v446 = vpow.pop %v445
      %v447 = vmul.f32 %v437, 1.442695
      %v448 = vpow.pop %v447
      %v449 = vmul.f32 %v438, 1.442695
      %v450 = vpow.pop %v449
      %v451 = vmul.f32 %v439, 1.442695
      %v452 = vpow.pop %v451
      %v453 = vmul.f32 %v440, 1.442695
      %v454 = vpow.pop %v453
      %v455 = vmul.f32 %v441, 1.442695
      %v456 = vpow.pop %v455
      %v457 = vmul.f32 %v442, 1.442695
      %v458 = vpow.pop %v457
      %v459 = vadd.f32 %v444, %v448
      %v460 = vadd.f32 %v459, %v452
      %v461 = vadd.f32 %v460, %v456
      %v462 = vrot.slane %v461, 4
      %v463 = vadd.f32 %v461, %v462
      %v464 = vrot.slane %v463, 2
      %v465 = vadd.f32 %v463, %v464
      %v466 = vrot.slane %v465, 1
      %v467 = vadd.f32 %v465, %v466
      %v468 = vadd.f32 %v446, %v450
      %v469 = vadd.f32 %v468, %v454
      %v470 = vadd.f32 %v469, %v458
      %v471 = vrot.slane %v470, 4
      %v472 = vadd.f32 %v470, %v471
      %v473 = vrot.slane %v472, 2
      %v474 = vadd.f32 %v472, %v473
      %v475 = vrot.slane %v474, 1
      %v476 = vadd.f32 %v474, %v475
      %v477 = vrcp.pop %v467
      %v478 = vmul.f32 %v444, %v477
      %v479 = vrcp.pop %v476
      %v480 = vmul.f32 %v446, %v479
      %v481 = vmul.f32 %v448, %v477
      %v482 = vmul.f32 %v450, %v479
      %v483 = vmul.f32 %v452, %v477
      %v484 = vmul.f32 %v454, %v479
      %v485 = vmul.f32 %v456, %v477
      %v486 = vmul.f32 %v458, %v479
      %487 = vset.pattern.permute.xlu0 3
      %488 = vperm.xlu0 %487, %v369
      %v489 = vpop.permute.xlu0 %488
      %491 = vset.pattern.permute.xlu0 3
      %492 = vperm.xlu0 %491, %v370
      %v493 = vpop.permute.xlu0 %492
      %495 = vset.pattern.permute.xlu0 3
      %496 = vperm.xlu0 %495, %v371
      %v497 = vpop.permute.xlu0 %496
      %499 = vset.pattern.permute.xlu0 3
      %500 = vperm.xlu0 %499, %v372
      %v501 = vpop.permute.xlu0 %500
      %v503 = vmul.f32 %v373, %v489
      %v504 = vmul.f32 %v374, %v489
      %v505 = vmul.f32 %v375, %v493
      %v506 = vmul.f32 %v376, %v493
      %v507 = vmul.f32 %v377, %v497
      %v508 = vmul.f32 %v378, %v497
      %v509 = vmul.f32 %v379, %v501
      %v510 = vmul.f32 %v380, %v501
      %v511 = vmax.f32 %v503, %v507
      %v512 = vmax.f32 %v505, %v509
      %v513 = vmax.f32 %v511, %v512
      %v514 = vrot.slane %v513, 4
      %v515 = vmax.f32 %v513, %v514
      %v516 = vrot.slane %v515, 2
      %v517 = vmax.f32 %v515, %v516
      %v518 = vrot.slane %v517, 1
      %v519 = vmax.f32 %v517, %v518
      %v520 = vmax.f32 %v504, %v508
      %v521 = vmax.f32 %v506, %v510
      %v522 = vmax.f32 %v520, %v521
      %v523 = vrot.slane %v522, 4
      %v524 = vmax.f32 %v522, %v523
      %v525 = vrot.slane %v524, 2
      %v526 = vmax.f32 %v524, %v525
      %v527 = vrot.slane %v526, 1
      %v528 = vmax.f32 %v526, %v527
      %v529 = vsub.f32 %v503, %v519
      %v530 = vsub.f32 %v504, %v528
      %v531 = vsub.f32 %v505, %v519
      %v532 = vsub.f32 %v506, %v528
      %v533 = vsub.f32 %v507, %v519
      %v534 = vsub.f32 %v508, %v528
      %v535 = vsub.f32 %v509, %v519
      %v536 = vsub.f32 %v510, %v528
      %v537 = vmul.f32 %v529, 1.442695
      %v538 = vpow.pop %v537
      %v539 = vmul.f32 %v530, 1.442695
      %v540 = vpow.pop %v539
      %v541 = vmul.f32 %v531, 1.442695
      %v542 = vpow.pop %v541
      %v543 = vmul.f32 %v532, 1.442695
      %v544 = vpow.pop %v543
      %v545 = vmul.f32 %v533, 1.442695
      %v546 = vpow.pop %v545
      %v547 = vmul.f32 %v534, 1.442695
      %v548 = vpow.pop %v547
      %v549 = vmul.f32 %v535, 1.442695
      %v550 = vpow.pop %v549
      %v551 = vmul.f32 %v536, 1.442695
      %v552 = vpow.pop %v551
      %v553 = vadd.f32 %v538, %v542
      %v554 = vadd.f32 %v553, %v546
      %v555 = vadd.f32 %v554, %v550
      %v556 = vrot.slane %v555, 4
      %v557 = vadd.f32 %v555, %v556
      %v558 = vrot.slane %v557, 2
      %v559 = vadd.f32 %v557, %v558
      %v560 = vrot.slane %v559, 1
      %v561 = vadd.f32 %v559, %v560
      %v562 = vadd.f32 %v540, %v544
      %v563 = vadd.f32 %v562, %v548
      %v564 = vadd.f32 %v563, %v552
      %v565 = vrot.slane %v564, 4
      %v566 = vadd.f32 %v564, %v565
      %v567 = vrot.slane %v566, 2
      %v568 = vadd.f32 %v566, %v567
      %v569 = vrot.slane %v568, 1
      %v570 = vadd.f32 %v568, %v569
      %v571 = vrcp.pop %v561
      %v572 = vmul.f32 %v538, %v571
      %v573 = vrcp.pop %v570
      %v574 = vmul.f32 %v540, %v573
      %v575 = vmul.f32 %v542, %v571
      %v576 = vmul.f32 %v544, %v573
      %v577 = vmul.f32 %v546, %v571
      %v578 = vmul.f32 %v548, %v573
      %v579 = vmul.f32 %v550, %v571
      %v580 = vmul.f32 %v552, %v573
      %581 = vset.pattern.permute.xlu0 1
      %582 = vperm.xlu0 %581, %v369
      %v583 = vpop.permute.xlu0 %582
      %585 = vset.pattern.permute.xlu0 1
      %586 = vperm.xlu0 %585, %v370
      %v587 = vpop.permute.xlu0 %586
      %589 = vset.pattern.permute.xlu0 1
      %590 = vperm.xlu0 %589, %v371
      %v591 = vpop.permute.xlu0 %590
      %593 = vset.pattern.permute.xlu0 1
      %594 = vperm.xlu0 %593, %v372
      %v595 = vpop.permute.xlu0 %594
      %v597 = vmul.f32 %v381, %v583
      %v598 = vmul.f32 %v382, %v587
      %v599 = vmul.f32 %v383, %v591
      %v600 = vmul.f32 %v384, %v595
      %vm601 = vcmask 523264
      %v602 = vsel %vm601, %v597, -inf
      %v603 = vsel %vm601, %v598, -inf
      %v604 = vsel %vm601, %v599, -inf
      %v605 = vsel %vm601, %v600, -inf
      %v606 = vmax.f32 %v602, %v603
      %v607 = vmax.f32 %v604, %v605
      %v608 = vmax.f32 %v606, %v607
      %v609 = vrot.slane %v608, 4
      %v610 = vmax.f32 %v608, %v609
      %v611 = vrot.slane %v610, 2
      %v612 = vmax.f32 %v610, %v611
      %v613 = vrot.slane %v612, 1
      %v614 = vmax.f32 %v612, %v613
      %v615 = vsub.f32 %v597, %v614
      %v616 = vsub.f32 %v598, %v614
      %v617 = vsub.f32 %v599, %v614
      %v618 = vsub.f32 %v600, %v614
      %v619 = vmul.f32 %v615, 1.442695
      %v620 = vpow.pop %v619
      %v621 = vmul.f32 %v616, 1.442695
      %v622 = vpow.pop %v621
      %v623 = vmul.f32 %v617, 1.442695
      %v624 = vpow.pop %v623
      %v625 = vmul.f32 %v618, 1.442695
      %v626 = vpow.pop %v625
      %v627 = vsel %vm601, %v620, 0.0
      %v628 = vsel %vm601, %v622, 0.0
      %v629 = vadd.f32 %v627, %v628
      %v630 = vsel %vm601, %v624, 0.0
      %v631 = vadd.f32 %v629, %v630
      %v632 = vsel %vm601, %v626, 0.0
      %v633 = vadd.f32 %v631, %v632
      %v634 = vrot.slane %v633, 4
      %v635 = vadd.f32 %v633, %v634
      %v636 = vrot.slane %v635, 2
      %v637 = vadd.f32 %v635, %v636
      %v638 = vrot.slane %v637, 1
      %v639 = vadd.f32 %v637, %v638
      %v640 = vrcp.pop %v639
      %v641 = vmul.f32 %v620, %v640
      %v642 = vmul.f32 %v622, %v640
      %v643 = vmul.f32 %v624, %v640
      %v644 = vmul.f32 %v626, %v640
      %645 = vset.pattern.permute.xlu0 4
      %646 = vperm.xlu0 %645, %v369
      %v647 = vpop.permute.xlu0 %646
      %649 = vset.pattern.permute.xlu0 4
      %650 = vperm.xlu0 %649, %v370
      %v651 = vpop.permute.xlu0 %650
      %653 = vset.pattern.permute.xlu0 4
      %654 = vperm.xlu0 %653, %v371
      %v655 = vpop.permute.xlu0 %654
      %657 = vset.pattern.permute.xlu0 4
      %658 = vperm.xlu0 %657, %v372
      %v659 = vpop.permute.xlu0 %658
      %v661 = vmul.f32 %v381, %v647
      %v662 = vmul.f32 %v382, %v651
      %v663 = vmul.f32 %v383, %v655
      %v664 = vmul.f32 %v384, %v659
      %v665 = vsel %vm601, %v661, -inf
      %v666 = vsel %vm601, %v662, -inf
      %v667 = vsel %vm601, %v663, -inf
      %v668 = vsel %vm601, %v664, -inf
      %v669 = vmax.f32 %v665, %v666
      %v670 = vmax.f32 %v667, %v668
      %v671 = vmax.f32 %v669, %v670
      %v672 = vrot.slane %v671, 4
      %v673 = vmax.f32 %v671, %v672
      %v674 = vrot.slane %v673, 2
      %v675 = vmax.f32 %v673, %v674
      %v676 = vrot.slane %v675, 1
      %v677 = vmax.f32 %v675, %v676
      %v678 = vsub.f32 %v661, %v677
      %v679 = vsub.f32 %v662, %v677
      %v680 = vsub.f32 %v663, %v677
      %v681 = vsub.f32 %v664, %v677
      %v682 = vmul.f32 %v678, 1.442695
      %v683 = vpow.pop %v682
      %v684 = vmul.f32 %v679, 1.442695
      %v685 = vpow.pop %v684
      %v686 = vmul.f32 %v680, 1.442695
      %v687 = vpow.pop %v686
      %v688 = vmul.f32 %v681, 1.442695
      %v689 = vpow.pop %v688
      %v690 = vsel %vm601, %v683, 0.0
      %v691 = vsel %vm601, %v685, 0.0
      %v692 = vadd.f32 %v690, %v691
      %v693 = vsel %vm601, %v687, 0.0
      %v694 = vadd.f32 %v692, %v693
      %v695 = vsel %vm601, %v689, 0.0
      %v696 = vadd.f32 %v694, %v695
      %v697 = vrot.slane %v696, 4
      %v698 = vadd.f32 %v696, %v697
      %v699 = vrot.slane %v698, 2
      %v700 = vadd.f32 %v698, %v699
      %v701 = vrot.slane %v700, 1
      %v702 = vadd.f32 %v700, %v701
      %v703 = vrcp.pop %v702
      %v704 = vmul.f32 %v683, %v703
      %v705 = vmul.f32 %v685, %v703
      %v706 = vmul.f32 %v687, %v703
      %v707 = vmul.f32 %v689, %v703
      %708 = vset.pattern.permute.xlu0 2
      %709 = vperm.xlu0 %708, %v369
      %v710 = vpop.permute.xlu0 %709
      %712 = vset.pattern.permute.xlu0 2
      %713 = vperm.xlu0 %712, %v370
      %v714 = vpop.permute.xlu0 %713
      %716 = vset.pattern.permute.xlu0 2
      %717 = vperm.xlu0 %716, %v371
      %v718 = vpop.permute.xlu0 %717
      %720 = vset.pattern.permute.xlu0 2
      %721 = vperm.xlu0 %720, %v372
      %v722 = vpop.permute.xlu0 %721
      %v724 = vmul.f32 %v385, %v710
      %v725 = vmul.f32 %v386, %v714
      %v726 = vmul.f32 %v387, %v718
      %v727 = vmul.f32 %v388, %v722
      %vm728 = vcmask 130048
      %v729 = vsel %vm728, %v724, -inf
      %v730 = vsel %vm728, %v725, -inf
      %v731 = vsel %vm728, %v726, -inf
      %v732 = vsel %vm728, %v727, -inf
      %v733 = vmax.f32 %v729, %v730
      %v734 = vmax.f32 %v731, %v732
      %v735 = vmax.f32 %v733, %v734
      %v736 = vrot.slane %v735, 4
      %v737 = vmax.f32 %v735, %v736
      %v738 = vrot.slane %v737, 2
      %v739 = vmax.f32 %v737, %v738
      %v740 = vrot.slane %v739, 1
      %v741 = vmax.f32 %v739, %v740
      %v742 = vsub.f32 %v724, %v741
      %v743 = vsub.f32 %v725, %v741
      %v744 = vsub.f32 %v726, %v741
      %v745 = vsub.f32 %v727, %v741
      %v746 = vmul.f32 %v742, 1.442695
      %v747 = vpow.pop %v746
      %v748 = vmul.f32 %v743, 1.442695
      %v749 = vpow.pop %v748
      %v750 = vmul.f32 %v744, 1.442695
      %v751 = vpow.pop %v750
      %v752 = vmul.f32 %v745, 1.442695
      %v753 = vpow.pop %v752
      %v754 = vsel %vm728, %v747, 0.0
      %v755 = vsel %vm728, %v749, 0.0
      %v756 = vadd.f32 %v754, %v755
      %v757 = vsel %vm728, %v751, 0.0
      %v758 = vadd.f32 %v756, %v757
      %v759 = vsel %vm728, %v753, 0.0
      %v760 = vadd.f32 %v758, %v759
      %v761 = vrot.slane %v760, 4
      %v762 = vadd.f32 %v760, %v761
      %v763 = vrot.slane %v762, 2
      %v764 = vadd.f32 %v762, %v763
      %v765 = vrot.slane %v764, 1
      %v766 = vadd.f32 %v764, %v765
      %v767 = vrcp.pop %v766
      %v768 = vmul.f32 %v747, %v767
      %v769 = vmul.f32 %v749, %v767
      %v770 = vmul.f32 %v751, %v767
      %v771 = vmul.f32 %v753, %v767
      %772 = vset.pattern.permute.xlu0 5
      %773 = vperm.xlu0 %772, %v369
      %v774 = vpop.permute.xlu0 %773
      %776 = vset.pattern.permute.xlu0 5
      %777 = vperm.xlu0 %776, %v370
      %v778 = vpop.permute.xlu0 %777
      %780 = vset.pattern.permute.xlu0 5
      %781 = vperm.xlu0 %780, %v371
      %v782 = vpop.permute.xlu0 %781
      %784 = vset.pattern.permute.xlu0 5
      %785 = vperm.xlu0 %784, %v372
      %v786 = vpop.permute.xlu0 %785
      %v788 = vmul.f32 %v385, %v774
      %v789 = vmul.f32 %v386, %v778
      %v790 = vmul.f32 %v387, %v782
      %v791 = vmul.f32 %v388, %v786
      %v792 = vsel %vm728, %v788, -inf
      %v793 = vsel %vm728, %v789, -inf
      %v794 = vsel %vm728, %v790, -inf
      %v795 = vsel %vm728, %v791, -inf
      %v796 = vmax.f32 %v792, %v793
      %v797 = vmax.f32 %v794, %v795
      %v798 = vmax.f32 %v796, %v797
      %v799 = vrot.slane %v798, 4
      %v800 = vmax.f32 %v798, %v799
      %v801 = vrot.slane %v800, 2
      %v802 = vmax.f32 %v800, %v801
      %v803 = vrot.slane %v802, 1
      %v804 = vmax.f32 %v802, %v803
      %v805 = vsub.f32 %v788, %v804
      %v806 = vsub.f32 %v789, %v804
      %v807 = vsub.f32 %v790, %v804
      %v808 = vsub.f32 %v791, %v804
      %v809 = vmul.f32 %v805, 1.442695
      %v810 = vpow.pop %v809
      %v811 = vmul.f32 %v806, 1.442695
      %v812 = vpow.pop %v811
      %v813 = vmul.f32 %v807, 1.442695
      %v814 = vpow.pop %v813
      %v815 = vmul.f32 %v808, 1.442695
      %v816 = vpow.pop %v815
      %v817 = vsel %vm728, %v810, 0.0
      %v818 = vsel %vm728, %v812, 0.0
      %v819 = vadd.f32 %v817, %v818
      %v820 = vsel %vm728, %v814, 0.0
      %v821 = vadd.f32 %v819, %v820
      %v822 = vsel %vm728, %v816, 0.0
      %v823 = vadd.f32 %v821, %v822
      %v824 = vrot.slane %v823, 4
      %v825 = vadd.f32 %v823, %v824
      %v826 = vrot.slane %v825, 2
      %v827 = vadd.f32 %v825, %v826
      %v828 = vrot.slane %v827, 1
      %v829 = vadd.f32 %v827, %v828
      %v830 = vrcp.pop %v829
      %v831 = vmul.f32 %v810, %v830
      %v832 = vmul.f32 %v812, %v830
      %v833 = vmul.f32 %v814, %v830
      %v834 = vmul.f32 %v816, %v830
      %v835 = vpack.c.bf16 %v642, %v641
      %v836 = vpack.c.bf16 %v644, %v643
      %v837 = vpack.c.bf16 %v705, %v704
      %v838 = vpack.c.bf16 %v707, %v706
      %v839 = vld [vmem:[%s4] sm:$0xff]
      %v840 = vld [vmem:[%s4 + $0x8] sm:$0xff]
      %v841 = vld [vmem:[%s4 + $0x10] sm:$0xff]
      %v842 = vld [vmem:[%s4 + $0x18] sm:$0xff]
      %v843 = vld [vmem:[%s4 + $0x20] sm:$0xff]
      %v844 = vld [vmem:[%s4 + $0x28] sm:$0xff]
      %v845 = vld [vmem:[%s4 + $0x30] sm:$0xff]
      %v846 = vld [vmem:[%s4 + $0x38] sm:$0xff]
      %v855 = vunpack.c.l.b16 %v839
      %v856 = vunpack.c.h.b16 %v839
      %v857 = vunpack.c.l.b16 %v840
      %v858 = vunpack.c.h.b16 %v840
      %v859 = vunpack.c.l.b16 %v841
      %v860 = vunpack.c.h.b16 %v841
      %v861 = vunpack.c.l.b16 %v842
      %v862 = vunpack.c.h.b16 %v842
      %v863 = vunpack.c.l.b16 %v843
      %v864 = vunpack.c.h.b16 %v843
      %v865 = vunpack.c.l.b16 %v844
      %v866 = vunpack.c.h.b16 %v844
      %v867 = vunpack.c.l.b16 %v845
      %v868 = vunpack.c.h.b16 %v845
      %v869 = vunpack.c.l.b16 %v846
      %v870 = vunpack.c.h.b16 %v846
      %v871 = vpack.c.b16 %v857, %v855
      %v872 = vpack.c.b16 %v858, %v856
      %v873 = vpack.c.b16 %v861, %v859
      %v874 = vpack.c.b16 %v862, %v860
      %v875 = vpack.c.b16 %v865, %v863
      %v876 = vpack.c.b16 %v866, %v864
      %v877 = vpack.c.b16 %v869, %v867
      %v878 = vpack.c.b16 %v870, %v868
      %v888 = vsel %vm601, %v835, 0
      %v891 = vsel %vm601, %v836, 0
      %v894 = vsel %vm601, %v837, 0
      %v897 = vsel %vm601, %v838, 0
      %899 = vmatprep.subr.bf16.mxu0 0
      %900 = vmatpush1.bf16.msra.mxu0 0
      %901 = vmatprep.subr.bf16.mxu0 0
      %902 = vmatpush1.bf16.msra.mxu0 0
      %903 = vmatprep.subr.bf16.mxu0 0
      %904 = vmatpush1.bf16.msra.mxu0 0
      %905 = vmatprep.subr.bf16.mxu0 0
      %906 = vmatpush1.bf16.msra.mxu0 0
      %907 = vmatprep.subr.bf16.mxu0 %v878
      %908 = vmatpush1.bf16.msra.mxu0 %v877
      %909 = vmatprep.subr.bf16.mxu0 %v876
      %910 = vmatpush1.bf16.msra.mxu0 %v875
      %911 = vmatprep.subr.bf16.mxu0 %v874
      %912 = vmatpush1.bf16.msra.mxu0 %v873
      %913 = vmatprep.subr.bf16.mxu0 %v872
      %914 = vmatpush1.bf16.msra.mxu0 %v871
      %915 = vmatprep.subr.bf16.mxu0 0
      %916 = vmatpush2.bf16.msra.mxu0 0
      %917 = vmatprep.subr.bf16.mxu0 0
      %918 = vmatpush2.bf16.msra.mxu0 0
      %919 = vmatprep.subr.bf16.mxu0 0
      %920 = vmatpush2.bf16.msra.mxu0 0
      %921 = vmatprep.subr.bf16.mxu0 0
      %922 = vmatpush2.bf16.msra.mxu0 0
      %923 = vmatprep.subr.bf16.mxu0 0
      %924 = vmatpush2.bf16.msra.mxu0 0
      %925 = vmatprep.subr.bf16.mxu0 0
      %926 = vmatpush2.bf16.msra.mxu0 0
      %927 = vmatprep.subr.bf16.mxu0 0
      %928 = vmatpush2.bf16.msra.mxu0 0
      %929 = vmatprep.subr.bf16.mxu0 0
      %930 = vmatpush2.bf16.msra.mxu0 0
      %931 = vmatprep.mubr.bf16.mxu0 0
      %932 = vmatmul.mubr.bf16.gmra.mxu0 %v888
      %v933 = vpop.f32.mrf.mxu0
      %v934 = vadd.f32 0.0, %v933
      %v935 = vpop.f32.mrf.mxu0
      %v936 = vadd.f32 0.0, %v935
      %v937 = vpop.f32.mrf.mxu0
      %v938 = vadd.f32 0.0, %v937
      %v939 = vpop.f32.mrf.mxu0
      %v940 = vadd.f32 0.0, %v939
      %941 = vmatprep.mubr.bf16.mxu0 0
      %942 = vmatmul.mubr.bf16.gmra.mxu0 %v891
      %v943 = vpop.f32.mrf.mxu0
      %v944 = vadd.f32 0.0, %v943
      %v945 = vpop.f32.mrf.mxu0
      %v946 = vadd.f32 0.0, %v945
      %v947 = vpop.f32.mrf.mxu0
      %v948 = vadd.f32 0.0, %v947
      %v949 = vpop.f32.mrf.mxu0
      %v950 = vadd.f32 0.0, %v949
      %951 = vmatprep.mubr.bf16.mxu0 0
      %952 = vmatmul.mubr.bf16.gmra.mxu0 %v894
      %v953 = vpop.f32.mrf.mxu0
      %v954 = vadd.f32 0.0, %v953
      %v955 = vpop.f32.mrf.mxu0
      %v956 = vadd.f32 0.0, %v955
      %v957 = vpop.f32.mrf.mxu0
      %v958 = vadd.f32 0.0, %v957
      %v959 = vpop.f32.mrf.mxu0
      %v960 = vadd.f32 0.0, %v959
      %961 = vmatprep.mubr.bf16.mxu0 0
      %962 = vmatmul.mubr.bf16.gmra.mxu0 %v897
      %v963 = vpop.f32.mrf.mxu0
      %v964 = vadd.f32 0.0, %v963
      %v965 = vpop.f32.mrf.mxu0
      %v966 = vadd.f32 0.0, %v965
      %v967 = vpop.f32.mrf.mxu0
      %v968 = vadd.f32 0.0, %v967
      %v969 = vpop.f32.mrf.mxu0
      %v970 = vadd.f32 0.0, %v969
      %971 = vdwg.mxu0
      %v972 = vadd.f32 %v478, %v934
      %v973 = vadd.f32 %v480, %v936
      %v974 = vadd.f32 %v481, %v938
      %v975 = vadd.f32 %v482, %v940
      %v976 = vadd.f32 %v483, %v944
      %v977 = vadd.f32 %v484, %v946
      %v978 = vadd.f32 %v485, %v948
      %v979 = vadd.f32 %v486, %v950
      %v980 = vadd.f32 %v572, %v954
      %v981 = vadd.f32 %v574, %v956
      %v982 = vadd.f32 %v575, %v958
      %v983 = vadd.f32 %v576, %v960
      %v984 = vadd.f32 %v577, %v964
      %v985 = vadd.f32 %v578, %v966
      %v986 = vadd.f32 %v579, %v968
      %v987 = vadd.f32 %v580, %v970
      %v988 = vpack.c.bf16 %v769, %v768
      %v989 = vpack.c.bf16 %v771, %v770
      %v990 = vpack.c.bf16 %v832, %v831
      %v991 = vpack.c.bf16 %v834, %v833
      %v992 = vld [vmem:[%s5] sm:$0xff]
      %v993 = vld [vmem:[%s5 + $0x8] sm:$0xff]
      %v996 = vunpack.c.l.b16 %v992
      %v997 = vunpack.c.h.b16 %v992
      %v998 = vunpack.c.l.b16 %v993
      %v999 = vunpack.c.h.b16 %v993
      %v1000 = vpack.c.b16 %v998, %v996
      %v1001 = vpack.c.b16 %v999, %v997
      %v1005 = vsel %vm728, %v988, 0
      %v1008 = vsel %vm728, %v989, 0
      %v1011 = vsel %vm728, %v990, 0
      %v1014 = vsel %vm728, %v991, 0
      %1016 = vmatprep.subr.bf16.mxu0 0
      %1017 = vmatpush1.bf16.msra.mxu0 0
      %1018 = vmatprep.subr.bf16.mxu0 0
      %1019 = vmatpush1.bf16.msra.mxu0 0
      %1020 = vmatprep.subr.bf16.mxu0 0
      %1021 = vmatpush1.bf16.msra.mxu0 0
      %1022 = vmatprep.subr.bf16.mxu0 0
      %1023 = vmatpush1.bf16.msra.mxu0 0
      %1024 = vmatprep.subr.bf16.mxu0 0
      %1025 = vmatpush1.bf16.msra.mxu0 0
      %1026 = vmatprep.subr.bf16.mxu0 0
      %1027 = vmatpush1.bf16.msra.mxu0 0
      %1028 = vmatprep.subr.bf16.mxu0 0
      %1029 = vmatpush1.bf16.msra.mxu0 0
      %1030 = vmatprep.subr.bf16.mxu0 %v1001
      %1031 = vmatpush1.bf16.msra.mxu0 %v1000
      %1032 = vmatprep.subr.bf16.mxu0 0
      %1033 = vmatpush2.bf16.msra.mxu0 0
      %1034 = vmatprep.subr.bf16.mxu0 0
      %1035 = vmatpush2.bf16.msra.mxu0 0
      %1036 = vmatprep.subr.bf16.mxu0 0
      %1037 = vmatpush2.bf16.msra.mxu0 0
      %1038 = vmatprep.subr.bf16.mxu0 0
      %1039 = vmatpush2.bf16.msra.mxu0 0
      %1040 = vmatprep.subr.bf16.mxu0 0
      %1041 = vmatpush2.bf16.msra.mxu0 0
      %1042 = vmatprep.subr.bf16.mxu0 0
      %1043 = vmatpush2.bf16.msra.mxu0 0
      %1044 = vmatprep.subr.bf16.mxu0 0
      %1045 = vmatpush2.bf16.msra.mxu0 0
      %1046 = vmatprep.subr.bf16.mxu0 0
      %1047 = vmatpush2.bf16.msra.mxu0 0
      %1048 = vmatprep.mubr.bf16.mxu0 0
      %1049 = vmatmul.mubr.bf16.gmra.mxu0 %v1005
      %v1050 = vpop.f32.mrf.mxu0
      %v1051 = vadd.f32 0.0, %v1050
      %v1052 = vpop.f32.mrf.mxu0
      %v1053 = vadd.f32 0.0, %v1052
      %v1054 = vpop.f32.mrf.mxu0
      %v1055 = vadd.f32 0.0, %v1054
      %v1056 = vpop.f32.mrf.mxu0
      %v1057 = vadd.f32 0.0, %v1056
      %1058 = vmatprep.mubr.bf16.mxu0 0
      %1059 = vmatmul.mubr.bf16.gmra.mxu0 %v1008
      %v1060 = vpop.f32.mrf.mxu0
      %v1061 = vadd.f32 0.0, %v1060
      %v1062 = vpop.f32.mrf.mxu0
      %v1063 = vadd.f32 0.0, %v1062
      %v1064 = vpop.f32.mrf.mxu0
      %v1065 = vadd.f32 0.0, %v1064
      %v1066 = vpop.f32.mrf.mxu0
      %v1067 = vadd.f32 0.0, %v1066
      %1068 = vmatprep.mubr.bf16.mxu0 0
      %1069 = vmatmul.mubr.bf16.gmra.mxu0 %v1011
      %v1070 = vpop.f32.mrf.mxu0
      %v1071 = vadd.f32 0.0, %v1070
      %v1072 = vpop.f32.mrf.mxu0
      %v1073 = vadd.f32 0.0, %v1072
      %v1074 = vpop.f32.mrf.mxu0
      %v1075 = vadd.f32 0.0, %v1074
      %v1076 = vpop.f32.mrf.mxu0
      %v1077 = vadd.f32 0.0, %v1076
      %1078 = vmatprep.mubr.bf16.mxu0 0
      %1079 = vmatmul.mubr.bf16.gmra.mxu0 %v1014
      %v1080 = vpop.f32.mrf.mxu0
      %v1081 = vadd.f32 0.0, %v1080
      %v1082 = vpop.f32.mrf.mxu0
      %v1083 = vadd.f32 0.0, %v1082
      %v1084 = vpop.f32.mrf.mxu0
      %v1085 = vadd.f32 0.0, %v1084
      %v1086 = vpop.f32.mrf.mxu0
      %v1087 = vadd.f32 0.0, %v1086
      %1088 = vdwg.mxu0
      %v1089 = vadd.f32 %v972, %v1051
      %v1090 = vadd.f32 %v973, %v1053
      %v1091 = vadd.f32 %v974, %v1055
      %v1092 = vadd.f32 %v975, %v1057
      %v1093 = vadd.f32 %v976, %v1061
      %v1094 = vadd.f32 %v977, %v1063
      %v1095 = vadd.f32 %v978, %v1065
      %v1096 = vadd.f32 %v979, %v1067
      %v1097 = vadd.f32 %v980, %v1071
      %v1098 = vadd.f32 %v981, %v1073
      %v1099 = vadd.f32 %v982, %v1075
      %v1100 = vadd.f32 %v983, %v1077
      %v1101 = vadd.f32 %v984, %v1081
      %v1102 = vadd.f32 %v985, %v1083
      %v1103 = vadd.f32 %v986, %v1085
      %v1104 = vadd.f32 %v987, %v1087
      %v1105 = vld [vmem:[%s6] sm:$0xf]
      %v1106 = vld [vmem:[%s6 + $0x4] sm:$0xf]
      %v1107 = vld [vmem:[%s6 + $0x8] sm:$0xf]
      %v1108 = vld [vmem:[%s6 + $0xc] sm:$0xf]
      %v1109 = vpack.c.bf16 %v1091, %v1089
      %v1110 = vpack.c.bf16 %v1092, %v1090
      %v1111 = vpack.c.bf16 %v1095, %v1093
      %v1112 = vpack.c.bf16 %v1096, %v1094
      %v1113 = vpack.c.bf16 %v1099, %v1097
      %v1114 = vpack.c.bf16 %v1100, %v1098
      %v1115 = vpack.c.bf16 %v1103, %v1101
      %v1116 = vpack.c.bf16 %v1104, %v1102
      %v1121 = vunpack.c.l.b16 %v1105
      %v1122 = vunpack.c.l.b16 %v1106
      %v1123 = vunpack.c.l.b16 %v1107
      %v1124 = vunpack.c.l.b16 %v1108
      %v1125 = vpack.c.b16 %v1122, %v1121
      %v1126 = vpack.c.b16 %v1124, %v1123
      %v1128 = vsel %vm601, %v1125, 0
      %v1131 = vsel %vm601, %v1126, 0
      %1133 = vmatprep.subr.bf16.mxu0 0
      %1134 = vmatpush1.bf16.msra.mxu0 0
      %1135 = vmatprep.subr.bf16.mxu0 0
      %1136 = vmatpush1.bf16.msra.mxu0 0
      %1137 = vmatprep.subr.bf16.mxu0 0
      %1138 = vmatpush1.bf16.msra.mxu0 0
      %1139 = vmatprep.subr.bf16.mxu0 0
      %1140 = vmatpush1.bf16.msra.mxu0 0
      %1141 = vmatprep.subr.bf16.mxu0 %v1116
      %1142 = vmatpush1.bf16.msra.mxu0 %v1115
      %1143 = vmatprep.subr.bf16.mxu0 %v1114
      %1144 = vmatpush1.bf16.msra.mxu0 %v1113
      %1145 = vmatprep.subr.bf16.mxu0 %v1112
      %1146 = vmatpush1.bf16.msra.mxu0 %v1111
      %1147 = vmatprep.subr.bf16.mxu0 %v1110
      %1148 = vmatpush1.bf16.msra.mxu0 %v1109
      %1149 = vmatprep.subr.bf16.mxu0 0
      %1150 = vmatpush2.bf16.msra.mxu0 0
      %1151 = vmatprep.subr.bf16.mxu0 0
      %1152 = vmatpush2.bf16.msra.mxu0 0
      %1153 = vmatprep.subr.bf16.mxu0 0
      %1154 = vmatpush2.bf16.msra.mxu0 0
      %1155 = vmatprep.subr.bf16.mxu0 0
      %1156 = vmatpush2.bf16.msra.mxu0 0
      %1157 = vmatprep.subr.bf16.mxu0 0
      %1158 = vmatpush2.bf16.msra.mxu0 0
      %1159 = vmatprep.subr.bf16.mxu0 0
      %1160 = vmatpush2.bf16.msra.mxu0 0
      %1161 = vmatprep.subr.bf16.mxu0 0
      %1162 = vmatpush2.bf16.msra.mxu0 0
      %1163 = vmatprep.subr.bf16.mxu0 0
      %1164 = vmatpush2.bf16.msra.mxu0 0
      %1165 = vmatprep.mubr.bf16.mxu0 0
      %1166 = vmatmul.mubr.bf16.gmra.mxu0 %v1128
      %v1167 = vpop.f32.mrf.mxu0
      %v1168 = vadd.f32 0.0, %v1167
      %v1169 = vpop.f32.mrf.mxu0
      %v1170 = vadd.f32 0.0, %v1169
      %v1171 = vpop.f32.mrf.mxu0
      %v1172 = vadd.f32 0.0, %v1171
      %v1173 = vpop.f32.mrf.mxu0
      %v1174 = vadd.f32 0.0, %v1173
      %1175 = vmatprep.mubr.bf16.mxu0 0
      %1176 = vmatmul.mubr.bf16.gmra.mxu0 %v1131
      %v1177 = vpop.f32.mrf.mxu0
      %v1178 = vadd.f32 0.0, %v1177
      %v1179 = vpop.f32.mrf.mxu0
      %v1180 = vadd.f32 0.0, %v1179
      %v1181 = vpop.f32.mrf.mxu0
      %v1182 = vadd.f32 0.0, %v1181
      %v1183 = vpop.f32.mrf.mxu0
      %v1184 = vadd.f32 0.0, %v1183
      %1185 = vdwg.mxu0
      %v1186 = vld [vmem:[#allocation2] sm:$0x1]
      %v1188 = vlaneseq
      %v1189 = vshrl.u32 %v1188, 7
      %v1190 = vsub.s32 0, %v1189
      %v1191 = vrot.slane %v1186, %v1190
      %1192 = vset.pattern.permute.xlu0 0
      %1193 = vperm.xlu0 %1192, %v1191
      %v1194 = vpop.permute.xlu0 %1193
      %v1196 = vadd.f32 %v1168, %v1194
      %v1197 = vadd.f32 %v1170, %v1194
      %v1198 = vadd.f32 %v1172, %v1194
      %v1199 = vadd.f32 %v1174, %v1194
      %v1200 = vadd.f32 %v1178, %v1194
      %v1201 = vadd.f32 %v1180, %v1194
      %v1202 = vadd.f32 %v1182, %v1194
      %v1203 = vadd.f32 %v1184, %v1194
      %v1204 = vadd.f32 %v1196, %v1200
      %v1205 = vadd.f32 %v1197, %v1201
      %v1206 = vadd.f32 %v1198, %v1202
      %v1207 = vadd.f32 %v1199, %v1203
      %v1208 = vmul.f32 %v1196, %v1200
      %v1209 = vmul.f32 %v1197, %v1201
      %v1210 = vmul.f32 %v1198, %v1202
      %v1211 = vmul.f32 %v1199, %v1203
      %v1212 = vadd.f32 %v1204, %v1208
      %v1213 = vadd.f32 %v1205, %v1209
      %v1214 = vadd.f32 %v1206, %v1210
      %v1215 = vadd.f32 %v1207, %v1211
      %1216 = vst [vmem:[%s367] sm:$0xff] %v1212
      %1217 = vst [vmem:[%s367 + $0x8] sm:$0xff] %v1213
      %1218 = vst [vmem:[%s367 + $0x10] sm:$0xff] %v1214
      %1219 = vst [vmem:[%s367 + $0x18] sm:$0xff] %v1215
      %p1220 = scmp.lt.s32.totalorder %s21, 1
      %s1221 = scalar_select %p1220, %s21, 1
      %s1222 = smul.addr %s1221, 4
      %s1223 = smul.addr %s1222, 8
      %s1224 = scalar_lea.vmem %s8, %s1223
      // Predicated region
      $region53: #{build_model_kd_forward.2} parent=51 // pred_check
        %p1225 = pneg %p227
      $region54: #{build_model_kd_forward.2} parent=51 // pred_check_branch
        %1227 = sbr.rel (%p1225) target = $region56
      $region55: #{build_model_kd_forward.2} parent=51 // pred_region
        _
      $region56: #{build_model_kd_forward.2} parent=51 // pred_fallthru
        _
    $region52: #{build_model_kd_forward.2} parent=5 // pred_fallthru
      _
    %p1228 = scmp.le.s32.totalorder 2, %s16
    // Predicated region
    $region57: #{build_model_kd_forward.2} parent=5 // pred_check
      %p1229 = pneg %p1228
    $region58: #{build_model_kd_forward.2} parent=5 // pred_check_branch
      %1231 = sbr.rel (%p1229) target = $region60
    $region59: #{build_model_kd_forward.2} parent=5 // pred_region
      %s1232 = ssub.s32 %s16, 2
      // Predicated region
      $region61: #{build_model_kd_forward.2} parent=59 // pred_check
        %p1233 = pneg %p233
      $region62: #{build_model_kd_forward.2} parent=59 // pred_check_branch
        %1235 = sbr.rel (%p1233) target = $region64
      $region63: #{build_model_kd_forward.2} parent=59 // pred_region
        %p1236 = scmp.lt.s32.totalorder %s22, 1
        %s1237 = scalar_select %p1236, %s22, 1
        %s1238 = smul.addr %s1237, 4
        %s1239 = smul.addr %s1238, 8
        %s1240 = scalar_lea.vmem %s8, %s1239
      $region64: #{build_model_kd_forward.2} parent=59 // pred_fallthru
        _
    $region60: #{build_model_kd_forward.2} parent=5 // pred_fallthru
      _
  $region6: #{build_model_kd_forward.2} parent=0 // loop_footer
    %s20 = sadd.s32 1, %s16
  $region7: #{build_model_kd_forward.2} parent=0 // loop_footer_branch
    %15 = sbr.rel target = $region3
  $region8: #{build_model_kd_forward.2} parent=0 // loop_exit
    _

// kernel: build_model_kd_forward.3
$region0: #{build_model_kd_forward.3}
  #allocation0 [shape = 'u32[]', space=smem, size = 0x4, offset = 0x4, fixed_abs, tag = 'smem constant byte address 0x4 - core index']
  #allocation1 [shape = 'u32[144,128]{1,0:T(1,128)}', space=vmem, size = 0x12000, scoped, tag = 'internal scratch']
  #allocation2 [shape = 'f32[1,1]{1,0:T(1,128)}', space=vmem, size = 0x200, scoped, tag = 'scratch operand']
  #allocation3 [shape = 'f32[1,1]{1,0:T(1,128)}', space=vmem, size = 0x200, scoped, tag = 'scratch operand']
  #allocation4 [shape = 'f32[1,1]{1,0:T(1,128)}', space=vmem, size = 0x200, scoped, tag = 'scratch operand']
  #allocation5 [shape = 'f32[1,1]{1,0:T(1,128)}', space=vmem, size = 0x200, scoped, tag = 'scratch operand']
  #allocation6 [shape = 'f32[1,1]{1,0:T(1,128)}', space=vmem, size = 0x200, scoped, tag = 'scratch operand']
  %s0 = inlined_call_operand.vmem [shape: f32[256,128], index: 0, kind: input, shape index: {}]
  %s1 = inlined_call_operand.vmem [shape: f32[256,128], index: 1, kind: input, shape index: {}]
  %s2 = inlined_call_operand.vmem [shape: f32[256,128], index: 2, kind: input, shape index: {}]
  %s3 = inlined_call_operand.vmem [shape: f32[256,128], index: 3, kind: input, shape index: {}]
  %s4 = inlined_call_operand.vmem [shape: f32[256,128], index: 4, kind: input, shape index: {}]
  %s5 = inlined_call_operand.hbm [shape: f32[1,1], index: 5, kind: output, shape index: {0}]
  %s6 = inlined_call_operand.hbm [shape: f32[1,1], index: 6, kind: output, shape index: {1}]
  %7 = xla_tuple %s5, %s6
  %s8 = sld [smem:[#allocation0]]
  $region69: #{build_model_kd_forward.3} parent=0
    _
  %s10 = ssub.s32 1, %s8
  %s11 = scalar_select 0, %s10, %s8
  $region1: #{build_model_kd_forward.3} parent=0
    #allocation7 [shape = 'u8[512]{0}', space=vmem, size = 0x400, scoped, tag = 'output window, operand 0, single buffered']
    #allocation8 [shape = 's32[2]{0}', space=sflag, size = 0x8, scoped, tag = 'scoped memory for build_model_kd_forward.3']
    #allocation9 [shape = 'u8[512]{0}', space=vmem, size = 0x400, scoped, tag = 'output window, operand 1, single buffered']
    #allocation10 [shape = 's32[1]{0}', space=sflag, size = 0x4, scoped, tag = 'scoped memory for build_model_kd_forward.3']
    %12 = vsyncpa [#allocation8], 0
    %13 = vsyncpa [#allocation10], 0
    loop: start=0, step=1, limit=4
    $region2: #{build_model_kd_forward.3} parent=1 // loop_pre_header
      _
    $region3: #{build_model_kd_forward.3} parent=1 // loop_header
      %s15 = sphi 0, %s19
      %p16 = scmp.ge.s32.totalorder %s15, 4
      %s25 = sphi 0, %s27
      %s28 = sphi 0, %s25
      %s29 = sphi 0, %s28
      %s45 = sphi 0, %s29
      %s51 = sphi 0, %s53
      %s54 = sphi 0, %s51
      %s55 = sphi 0, %s54
      %s71 = sphi 0, %s55
      %s77 = sphi 0, %s79
      %s80 = sphi 0, %s77
      %s81 = sphi 0, %s80
      %s97 = sphi 0, %s81
      %s103 = sphi 0, %s105
      %s106 = sphi 0, %s103
      %s107 = sphi 0, %s106
      %s123 = sphi 0, %s107
      %s129 = sphi 0, %s131
      %s132 = sphi 0, %s129
      %s133 = sphi 0, %s132
      %s149 = sphi 0, %s133
      %s153 = sphi 0, %s153
      %s155 = sphi 0, %s153
      %s156 = sphi 0, %s155
      %s170 = sphi 0, %s156
      %s174 = sphi 0, %s174
      %s176 = sphi 0, %s174
      %s177 = sphi 0, %s176
      %s191 = sphi 0, %s177
    $region4: #{build_model_kd_forward.3} parent=1 // loop_header_branch
      %18 = sbr.rel (%p16) target = $region8
    $region5: #{build_model_kd_forward.3} parent=1 // loop_body
      %s20 = ssub.s32 %s15, 1
      %s21 = ssub.s32 %s15, 2
      %s22 = sadd.s32 %s15, 1
      %s23 = ssub.s32 %s15, %s22
      %p24 = scmp.eq.s32.totalorder %s23, 0
      %s26 = sadd.s32 %s25, 1
      %s27 = scalar_select %p24, %s25, %s26
      %p30 = pneg %p24
      %p31 = scmp.eq.s32.totalorder %s15, 1
      %p32 = por %p30, %p31
      %p33 = scmp.ne.s32.totalorder %s25, %s28
      %p34 = scmp.eq.s32.totalorder %s15, 0
      %p35 = por %p33, %p34
      %p36 = scmp.ne.s32.totalorder %s25, %s28
      %p37 = scmp.eq.s32.totalorder %s20, 1
      %p38 = por %p36, %p37
      %p39 = scmp.ne.s32.totalorder %s28, %s29
      %p40 = scmp.eq.s32.totalorder %s20, 0
      %p41 = por %p39, %p40
      %p42 = scmp.ne.s32.totalorder %s28, %s29
      %p43 = scmp.eq.s32.totalorder %s21, 1
      %p44 = por %p42, %p43
      %p46 = scmp.ne.s32.totalorder %s29, %s45
      %p47 = scmp.eq.s32.totalorder %s21, 0
      %p48 = por %p46, %p47
      %s49 = ssub.s32 %s15, %s22
      %p50 = scmp.eq.s32.totalorder %s49, 0
      %s52 = sadd.s32 %s51, 1
      %s53 = scalar_select %p50, %s51, %s52
      %p56 = pneg %p50
      %p57 = scmp.eq.s32.totalorder %s15, 1
      %p58 = por %p56, %p57
      %p59 = scmp.ne.s32.totalorder %s51, %s54
      %p60 = scmp.eq.s32.totalorder %s15, 0
      %p61 = por %p59, %p60
      %p62 = scmp.ne.s32.totalorder %s51, %s54
      %p63 = scmp.eq.s32.totalorder %s20, 1
      %p64 = por %p62, %p63
      %p65 = scmp.ne.s32.totalorder %s54, %s55
      %p66 = scmp.eq.s32.totalorder %s20, 0
      %p67 = por %p65, %p66
      %p68 = scmp.ne.s32.totalorder %s54, %s55
      %p69 = scmp.eq.s32.totalorder %s21, 1
      %p70 = por %p68, %p69
      %p72 = scmp.ne.s32.totalorder %s55, %s71
      %p73 = scmp.eq.s32.totalorder %s21, 0
      %p74 = por %p72, %p73
      %s75 = ssub.s32 %s15, %s22
      %p76 = scmp.eq.s32.totalorder %s75, 0
      %s78 = sadd.s32 %s77, 1
      %s79 = scalar_select %p76, %s77, %s78
      %p82 = pneg %p76
      %p83 = scmp.eq.s32.totalorder %s15, 1
      %p84 = por %p82, %p83
      %p85 = scmp.ne.s32.totalorder %s77, %s80
      %p86 = scmp.eq.s32.totalorder %s15, 0
      %p87 = por %p85, %p86
      %p88 = scmp.ne.s32.totalorder %s77, %s80
      %p89 = scmp.eq.s32.totalorder %s20, 1
      %p90 = por %p88, %p89
      %p91 = scmp.ne.s32.totalorder %s80, %s81
      %p92 = scmp.eq.s32.totalorder %s20, 0
      %p93 = por %p91, %p92
      %p94 = scmp.ne.s32.totalorder %s80, %s81
      %p95 = scmp.eq.s32.totalorder %s21, 1
      %p96 = por %p94, %p95
      %p98 = scmp.ne.s32.totalorder %s81, %s97
      %p99 = scmp.eq.s32.totalorder %s21, 0
      %p100 = por %p98, %p99
      %s101 = ssub.s32 %s15, %s22
      %p102 = scmp.eq.s32.totalorder %s101, 0
      %s104 = sadd.s32 %s103, 1
      %s105 = scalar_select %p102, %s103, %s104
      %p108 = pneg %p102
      %p109 = scmp.eq.s32.totalorder %s15, 1
      %p110 = por %p108, %p109
      %p111 = scmp.ne.s32.totalorder %s103, %s106
      %p112 = scmp.eq.s32.totalorder %s15, 0
      %p113 = por %p111, %p112
      %p114 = scmp.ne.s32.totalorder %s103, %s106
      %p115 = scmp.eq.s32.totalorder %s20, 1
      %p116 = por %p114, %p115
      %p117 = scmp.ne.s32.totalorder %s106, %s107
      %p118 = scmp.eq.s32.totalorder %s20, 0
      %p119 = por %p117, %p118
      %p120 = scmp.ne.s32.totalorder %s106, %s107
      %p121 = scmp.eq.s32.totalorder %s21, 1
      %p122 = por %p120, %p121
      %p124 = scmp.ne.s32.totalorder %s107, %s123
      %p125 = scmp.eq.s32.totalorder %s21, 0
      %p126 = por %p124, %p125
      %s127 = ssub.s32 %s15, %s22
      %p128 = scmp.eq.s32.totalorder %s127, 0
      %s130 = sadd.s32 %s129, 1
      %s131 = scalar_select %p128, %s129, %s130
      %p134 = pneg %p128
      %p135 = scmp.eq.s32.totalorder %s15, 1
      %p136 = por %p134, %p135
      %p137 = scmp.ne.s32.totalorder %s129, %s132
      %p138 = scmp.eq.s32.totalorder %s15, 0
      %p139 = por %p137, %p138
      %p140 = scmp.ne.s32.totalorder %s129, %s132
      %p141 = scmp.eq.s32.totalorder %s20, 1
      %p142 = por %p140, %p141
      %p143 = scmp.ne.s32.totalorder %s132, %s133
      %p144 = scmp.eq.s32.totalorder %s20, 0
      %p145 = por %p143, %p144
      %p146 = scmp.ne.s32.totalorder %s132, %s133
      %p147 = scmp.eq.s32.totalorder %s21, 1
      %p148 = por %p146, %p147
      %p150 = scmp.ne.s32.totalorder %s133, %s149
      %p151 = scmp.eq.s32.totalorder %s21, 0
      %p152 = por %p150, %p151
      %s154 = sadd.s32 %s153, 1
      %p157 = scmp.eq.s32.totalorder %s15, 1
      %p158 = scmp.ne.s32.totalorder %s153, %s155
      %p159 = scmp.eq.s32.totalorder %s15, 0
      %p160 = por %p158, %p159
      %p161 = scmp.ne.s32.totalorder %s153, %s155
      %p162 = scmp.eq.s32.totalorder %s20, 1
      %p163 = por %p161, %p162
      %p164 = scmp.ne.s32.totalorder %s155, %s156
      %p165 = scmp.eq.s32.totalorder %s20, 0
      %p166 = por %p164, %p165
      %p167 = scmp.ne.s32.totalorder %s155, %s156
      %p168 = scmp.eq.s32.totalorder %s21, 1
      %p169 = por %p167, %p168
      %p171 = scmp.ne.s32.totalorder %s156, %s170
      %p172 = scmp.eq.s32.totalorder %s21, 0
      %p173 = por %p171, %p172
      %s175 = sadd.s32 %s174, 1
      %p178 = scmp.eq.s32.totalorder %s15, 1
      %p179 = scmp.ne.s32.totalorder %s174, %s176
      %p180 = scmp.eq.s32.totalorder %s15, 0
      %p181 = por %p179, %p180
      %p182 = scmp.ne.s32.totalorder %s174, %s176
      %p183 = scmp.eq.s32.totalorder %s20, 1
      %p184 = por %p182, %p183
      %p185 = scmp.ne.s32.totalorder %s176, %s177
      %p186 = scmp.eq.s32.totalorder %s20, 0
      %p187 = por %p185, %p186
      %p188 = scmp.ne.s32.totalorder %s176, %s177
      %p189 = scmp.eq.s32.totalorder %s21, 1
      %p190 = por %p188, %p189
      %p192 = scmp.ne.s32.totalorder %s177, %s191
      %p193 = scmp.eq.s32.totalorder %s21, 0
      %p194 = por %p192, %p193
      %p195 = scmp.le.s32.totalorder 1, %s15
      %p196 = scmp.lt.s32.totalorder %s15, 3
      %p197 = pnand %p195, %p196
      %p198 = pneg %p197
      // Predicated region
      $region9: #{build_model_kd_forward.3} parent=5 // pred_check
        _
      $region10: #{build_model_kd_forward.3} parent=5 // pred_check_branch
        %200 = sbr.rel (%p197) target = $region12
      $region11: #{build_model_kd_forward.3} parent=5 // pred_region
        %s201 = ssub.s32 %s15, 1
      $region12: #{build_model_kd_forward.3} parent=5 // pred_fallthru
        _
      %p202 = scmp.lt.s32.totalorder %s15, 2
      // Predicated region
      $region13: #{build_model_kd_forward.3} parent=5 // pred_check
        %p203 = pneg %p202
      $region14: #{build_model_kd_forward.3} parent=5 // pred_check_branch
        %205 = sbr.rel (%p203) target = $region16
      $region15: #{build_model_kd_forward.3} parent=5 // pred_region
        // Predicated region
        $region17: #{build_model_kd_forward.3} parent=15 // pred_check
          %p206 = pneg %p35
        $region18: #{build_model_kd_forward.3} parent=15 // pred_check_branch
          %208 = sbr.rel (%p206) target = $region20
        $region19: #{build_model_kd_forward.3} parent=15 // pred_region
          %s209 = smul.u32 16, %s15
          %p210 = scmp.lt.s32.totalorder %s209, 31
          %s211 = scalar_select %p210, %s209, 31
          %s212 = smul.addr %s211, 8
          %s213 = scalar_lea.vmem %s0, %s212
          %s214 = smul.u32 16, %s15
        $region20: #{build_model_kd_forward.3} parent=15 // pred_fallthru
          _
        // Predicated region
        $region21: #{build_model_kd_forward.3} parent=15 // pred_check
          %p215 = pneg %p61
        $region22: #{build_model_kd_forward.3} parent=15 // pred_check_branch
          %217 = sbr.rel (%p215) target = $region24
        $region23: #{build_model_kd_forward.3} parent=15 // pred_region
          %s218 = smul.u32 16, %s15
          %p219 = scmp.lt.s32.totalorder %s218, 31
          %s220 = scalar_select %p219, %s218, 31
          %s221 = smul.addr %s220, 8
          %s222 = scalar_lea.vmem %s1, %s221
          %s223 = smul.u32 16, %s15
        $region24: #{build_model_kd_forward.3} parent=15 // pred_fallthru
          _
        // Predicated region
        $region25: #{build_model_kd_forward.3} parent=15 // pred_check
          %p224 = pneg %p87
        $region26: #{build_model_kd_forward.3} parent=15 // pred_check_branch
          %226 = sbr.rel (%p224) target = $region28
        $region27: #{build_model_kd_forward.3} parent=15 // pred_region
          %s227 = smul.u32 16, %s15
          %p228 = scmp.lt.s32.totalorder %s227, 31
          %s229 = scalar_select %p228, %s227, 31
          %s230 = smul.addr %s229, 8
          %s231 = scalar_lea.vmem %s2, %s230
          %s232 = smul.u32 16, %s15
        $region28: #{build_model_kd_forward.3} parent=15 // pred_fallthru
          _
        // Predicated region
        $region29: #{build_model_kd_forward.3} parent=15 // pred_check
          %p233 = pneg %p113
        $region30: #{build_model_kd_forward.3} parent=15 // pred_check_branch
          %235 = sbr.rel (%p233) target = $region32
        $region31: #{build_model_kd_forward.3} parent=15 // pred_region
          %s236 = smul.u32 16, %s15
          %p237 = scmp.lt.s32.totalorder %s236, 31
          %s238 = scalar_select %p237, %s236, 31
          %s239 = smul.addr %s238, 8
          %s240 = scalar_lea.vmem %s3, %s239
          %s241 = smul.u32 16, %s15
        $region32: #{build_model_kd_forward.3} parent=15 // pred_fallthru
          _
        // Predicated region
        $region33: #{build_model_kd_forward.3} parent=15 // pred_check
          %p242 = pneg %p139
        $region34: #{build_model_kd_forward.3} parent=15 // pred_check_branch
          %244 = sbr.rel (%p242) target = $region36
        $region35: #{build_model_kd_forward.3} parent=15 // pred_region
          %s245 = smul.u32 16, %s15
          %p246 = scmp.lt.s32.totalorder %s245, 31
          %s247 = scalar_select %p246, %s245, 31
          %s248 = smul.addr %s247, 8
          %s249 = scalar_lea.vmem %s4, %s248
          %s250 = smul.u32 16, %s15
        $region36: #{build_model_kd_forward.3} parent=15 // pred_fallthru
          _
      $region16: #{build_model_kd_forward.3} parent=5 // pred_fallthru
        _
      %p251 = scmp.le.s32.totalorder 1, %s15
      %p252 = scmp.lt.s32.totalorder %s15, 3
      %p253 = pnand %p251, %p252
      %p254 = pneg %p253
      // Predicated region
      $region37: #{build_model_kd_forward.3} parent=5 // pred_check
        _
      $region38: #{build_model_kd_forward.3} parent=5 // pred_check_branch
        %256 = sbr.rel (%p253) target = $region40
      $region39: #{build_model_kd_forward.3} parent=5 // pred_region
        %s257 = ssub.s32 %s15, 1
        %s258 = smul.u32 16, %s20
        %p259 = scmp.lt.s32.totalorder %s258, 31
        %s260 = scalar_select %p259, %s258, 31
        %s261 = smul.addr %s260, 8
        %s262 = scalar_lea.vmem %s0, %s261
        %p263 = pneg %p41
        %p264 = pneg %p38
        %s265 = smul.u32 16, %s20
        %p266 = scmp.lt.s32.totalorder %s265, 31
        %s267 = scalar_select %p266, %s265, 31
        %s268 = smul.addr %s267, 8
        %s269 = scalar_lea.vmem %s1, %s268
        %p270 = pneg %p67
        %p271 = pneg %p64
        %s272 = smul.u32 16, %s20
        %p273 = scmp.lt.s32.totalorder %s272, 31
        %s274 = scalar_select %p273, %s272, 31
        %s275 = smul.addr %s274, 8
        %s276 = scalar_lea.vmem %s2, %s275
        %p277 = pneg %p93
        %p278 = pneg %p90
        %s279 = smul.u32 16, %s20
        %p280 = scmp.lt.s32.totalorder %s279, 31
        %s281 = scalar_select %p280, %s279, 31
        %s282 = smul.addr %s281, 8
        %s283 = scalar_lea.vmem %s3, %s282
        %p284 = pneg %p119
        %p285 = pneg %p116
        %s286 = smul.u32 16, %s20
        %p287 = scmp.lt.s32.totalorder %s286, 31
        %s288 = scalar_select %p287, %s286, 31
        %s289 = smul.addr %s288, 8
        %s290 = scalar_lea.vmem %s4, %s289
        %p291 = pneg %p145
        %p292 = pneg %p142
        %p293 = pneg %p166
        %p294 = pneg %p163
        %p295 = pneg %p187
        %p296 = pneg %p184
        %s297 = smul.u32 16, %s20
        %p298 = scmp.lt.s32.totalorder %s297, 31
        %s299 = scalar_select %p298, %s297, 31
        %s300 = smul.addr %s299, 8
        %s301 = scalar_lea.vmem %s0, %s300
        %s302 = smul.u32 16, %s20
        %s303 = smul.u32 16, %s20
        %p304 = scmp.lt.s32.totalorder %s303, 31
        %s305 = scalar_select %p304, %s303, 31
        %s306 = smul.addr %s305, 8
        %s307 = scalar_lea.vmem %s1, %s306
        %s308 = smul.u32 16, %s20
        %s309 = smul.u32 16, %s20
        %p310 = scmp.lt.s32.totalorder %s309, 31
        %s311 = scalar_select %p310, %s309, 31
        %s312 = smul.addr %s311, 8
        %s313 = scalar_lea.vmem %s2, %s312
        %s314 = smul.u32 16, %s20
        %s315 = smul.u32 16, %s20
        %p316 = scmp.lt.s32.totalorder %s315, 31
        %s317 = scalar_select %p316, %s315, 31
        %s318 = smul.addr %s317, 8
        %s319 = scalar_lea.vmem %s3, %s318
        %s320 = smul.u32 16, %s20
        %s321 = smul.u32 16, %s20
        %p322 = scmp.lt.s32.totalorder %s321, 31
        %s323 = scalar_select %p322, %s321, 31
        %s324 = smul.addr %s323, 8
        %s325 = scalar_lea.vmem %s4, %s324
        %s326 = smul.u32 16, %s20
        %p327 = scmp.eq.s32.totalorder %s20, 0
        // Predicated region
        $region41: #{build_model_kd_forward.3} parent=39 // pred_check
          %p328 = pneg %p327
        $region42: #{build_model_kd_forward.3} parent=39 // pred_check_branch
          %330 = sbr.rel (%p328) target = $region44
        $region43: #{build_model_kd_forward.3} parent=39 // pred_region
          %vm331 = vcmask 0
          %332 = vst.msk [vmem:[#allocation2] sm:$0x1] %vm331, 0.0
          %333 = vst.msk [vmem:[#allocation3] sm:$0x1] %vm331, 0.0
          %334 = vst.msk [vmem:[#allocation4] sm:$0x1] %vm331, 0.0
          %335 = vst.msk [vmem:[#allocation5] sm:$0x1] %vm331, 0.0
          %336 = vst.msk [vmem:[#allocation6] sm:$0x1] %vm331, 0.0
          %337 = vst.msk [vmem:[#allocation7] sm:$0x1] %vm331, 0.0
          %338 = vst.msk [vmem:[#allocation9] sm:$0x1] %vm331, 0.0
        $region44: #{build_model_kd_forward.3} parent=39 // pred_fallthru
          _
        %v339 = vld [vmem:[%s301] sm:$0xff]
        %v340 = vld [vmem:[%s301 + $0x8] sm:$0xff]
        %v341 = vld [vmem:[%s301 + $0x10] sm:$0xff]
        %v342 = vld [vmem:[%s301 + $0x18] sm:$0xff]
        %v343 = vld [vmem:[%s301 + $0x20] sm:$0xff]
        %v344 = vld [vmem:[%s301 + $0x28] sm:$0xff]
        %v345 = vld [vmem:[%s301 + $0x30] sm:$0xff]
        %v346 = vld [vmem:[%s301 + $0x38] sm:$0xff]
        %v347 = vld [vmem:[%s301 + $0x40] sm:$0xff]
        %v348 = vld [vmem:[%s301 + $0x48] sm:$0xff]
        %v349 = vld [vmem:[%s301 + $0x50] sm:$0xff]
        %v350 = vld [vmem:[%s301 + $0x58] sm:$0xff]
        %v351 = vld [vmem:[%s301 + $0x60] sm:$0xff]
        %v352 = vld [vmem:[%s301 + $0x68] sm:$0xff]
        %v353 = vld [vmem:[%s301 + $0x70] sm:$0xff]
        %v354 = vld [vmem:[%s301 + $0x78] sm:$0xff]
        %v355 = vmul.f32 %v339, 0.003921569
        %v356 = vmul.f32 %v340, 0.003921569
        %v357 = vmul.f32 %v341, 0.003921569
        %v358 = vmul.f32 %v342, 0.003921569
        %v359 = vmul.f32 %v343, 0.003921569
        %v360 = vmul.f32 %v344, 0.003921569
        %v361 = vmul.f32 %v345, 0.003921569
        %v362 = vmul.f32 %v346, 0.003921569
        %v363 = vmul.f32 %v347, 0.003921569
        %v364 = vmul.f32 %v348, 0.003921569
        %v365 = vmul.f32 %v349, 0.003921569
        %v366 = vmul.f32 %v350, 0.003921569
        %v367 = vmul.f32 %v351, 0.003921569
        %v368 = vmul.f32 %v352, 0.003921569
        %v369 = vmul.f32 %v353, 0.003921569
        %v370 = vmul.f32 %v354, 0.003921569
        %v371 = vld [vmem:[%s307] sm:$0xff]
        %v372 = vld [vmem:[%s307 + $0x8] sm:$0xff]
        %v373 = vld [vmem:[%s307 + $0x10] sm:$0xff]
        %v374 = vld [vmem:[%s307 + $0x18] sm:$0xff]
        %v375 = vld [vmem:[%s307 + $0x20] sm:$0xff]
        %v376 = vld [vmem:[%s307 + $0x28] sm:$0xff]
        %v377 = vld [vmem:[%s307 + $0x30] sm:$0xff]
        %v378 = vld [vmem:[%s307 + $0x38] sm:$0xff]
        %v379 = vld [vmem:[%s307 + $0x40] sm:$0xff]
        %v380 = vld [vmem:[%s307 + $0x48] sm:$0xff]
        %v381 = vld [vmem:[%s307 + $0x50] sm:$0xff]
        %v382 = vld [vmem:[%s307 + $0x58] sm:$0xff]
        %v383 = vld [vmem:[%s307 + $0x60] sm:$0xff]
        %v384 = vld [vmem:[%s307 + $0x68] sm:$0xff]
        %v385 = vld [vmem:[%s307 + $0x70] sm:$0xff]
        %v386 = vld [vmem:[%s307 + $0x78] sm:$0xff]
        %v387 = vmul.f32 %v371, 0.003921569
        %v388 = vmul.f32 %v372, 0.003921569
        %v389 = vmul.f32 %v373, 0.003921569
        %v390 = vmul.f32 %v374, 0.003921569
        %v391 = vmul.f32 %v375, 0.003921569
        %v392 = vmul.f32 %v376, 0.003921569
        %v393 = vmul.f32 %v377, 0.003921569
        %v394 = vmul.f32 %v378, 0.003921569
        %v395 = vmul.f32 %v379, 0.003921569
        %v396 = vmul.f32 %v380, 0.003921569
        %v397 = vmul.f32 %v381, 0.003921569
        %v398 = vmul.f32 %v382, 0.003921569
        %v399 = vmul.f32 %v383, 0.003921569
        %v400 = vmul.f32 %v384, 0.003921569
        %v401 = vmul.f32 %v385, 0.003921569
        %v402 = vmul.f32 %v386, 0.003921569
        %vm403 = vcmp.ge.f32.partialorder %v355, 0.5
        %vm404 = vcmp.ge.f32.partialorder %v356, 0.5
        %vm405 = vcmp.ge.f32.partialorder %v357, 0.5
        %vm406 = vcmp.ge.f32.partialorder %v358, 0.5
        %vm407 = vcmp.ge.f32.partialorder %v359, 0.5
        %vm408 = vcmp.ge.f32.partialorder %v360, 0.5
        %vm409 = vcmp.ge.f32.partialorder %v361, 0.5
        %vm410 = vcmp.ge.f32.partialorder %v362, 0.5
        %vm411 = vcmp.ge.f32.partialorder %v363, 0.5
        %vm412 = vcmp.ge.f32.partialorder %v364, 0.5
        %vm413 = vcmp.ge.f32.partialorder %v365, 0.5
        %vm414 = vcmp.ge.f32.partialorder %v366, 0.5
        %vm415 = vcmp.ge.f32.partialorder %v367, 0.5
        %vm416 = vcmp.ge.f32.partialorder %v368, 0.5
        %vm417 = vcmp.ge.f32.partialorder %v369, 0.5
        %vm418 = vcmp.ge.f32.partialorder %v370, 0.5
        %v419 = vsel %vm403, 1.0, 0.0
        %v420 = vsel %vm404, 1.0, 0.0
        %v421 = vsel %vm405, 1.0, 0.0
        %v422 = vsel %vm406, 1.0, 0.0
        %v423 = vsel %vm407, 1.0, 0.0
        %v424 = vsel %vm408, 1.0, 0.0
        %v425 = vsel %vm409, 1.0, 0.0
        %v426 = vsel %vm410, 1.0, 0.0
        %v427 = vsel %vm411, 1.0, 0.0
        %v428 = vsel %vm412, 1.0, 0.0
        %v429 = vsel %vm413, 1.0, 0.0
        %v430 = vsel %vm414, 1.0, 0.0
        %v431 = vsel %vm415, 1.0, 0.0
        %v432 = vsel %vm416, 1.0, 0.0
        %v433 = vsel %vm417, 1.0, 0.0
        %v434 = vsel %vm418, 1.0, 0.0
        %vm435 = vcmp.ge.f32.partialorder %v387, 0.5
        %vm436 = vcmp.ge.f32.partialorder %v388, 0.5
        %vm437 = vcmp.ge.f32.partialorder %v389, 0.5
        %vm438 = vcmp.ge.f32.partialorder %v390, 0.5
        %vm439 = vcmp.ge.f32.partialorder %v391, 0.5
        %vm440 = vcmp.ge.f32.partialorder %v392, 0.5
        %vm441 = vcmp.ge.f32.partialorder %v393, 0.5
        %vm442 = vcmp.ge.f32.partialorder %v394, 0.5
        %vm443 = vcmp.ge.f32.partialorder %v395, 0.5
        %vm444 = vcmp.ge.f32.partialorder %v396, 0.5
        %vm445 = vcmp.ge.f32.partialorder %v397, 0.5
        %vm446 = vcmp.ge.f32.partialorder %v398, 0.5
        %vm447 = vcmp.ge.f32.partialorder %v399, 0.5
        %vm448 = vcmp.ge.f32.partialorder %v400, 0.5
        %vm449 = vcmp.ge.f32.partialorder %v401, 0.5
        %vm450 = vcmp.ge.f32.partialorder %v402, 0.5
        %v451 = vsel %vm435, 1.0, 0.0
        %v452 = vsel %vm436, 1.0, 0.0
        %v453 = vsel %vm437, 1.0, 0.0
        %v454 = vsel %vm438, 1.0, 0.0
        %v455 = vsel %vm439, 1.0, 0.0
        %v456 = vsel %vm440, 1.0, 0.0
        %v457 = vsel %vm441, 1.0, 0.0
        %v458 = vsel %vm442, 1.0, 0.0
        %v459 = vsel %vm443, 1.0, 0.0
        %v460 = vsel %vm444, 1.0, 0.0
        %v461 = vsel %vm445, 1.0, 0.0
        %v462 = vsel %vm446, 1.0, 0.0
        %v463 = vsel %vm447, 1.0, 0.0
        %v464 = vsel %vm448, 1.0, 0.0
        %v465 = vsel %vm449, 1.0, 0.0
        %v466 = vsel %vm450, 1.0, 0.0
        %v467 = vld [vmem:[#allocation2] sm:$0x1]
        %v468 = vmul.f32 %v419, %v451
        %v469 = vmul.f32 %v420, %v452
        %v470 = vmul.f32 %v421, %v453
        %v471 = vmul.f32 %v422, %v454
        %v472 = vmul.f32 %v423, %v455
        %v473 = vmul.f32 %v424, %v456
        %v474 = vmul.f32 %v425, %v457
        %v475 = vmul.f32 %v426, %v458
        %v476 = vmul.f32 %v427, %v459
        %v477 = vmul.f32 %v428, %v460
        %v478 = vmul.f32 %v429, %v461
        %v479 = vmul.f32 %v430, %v462
        %v480 = vmul.f32 %v431, %v463
        %v481 = vmul.f32 %v432, %v464
        %v482 = vmul.f32 %v433, %v465
        %v483 = vmul.f32 %v434, %v466
        %v484 = vadd.f32 %v468, %v469
        %v485 = vadd.f32 %v484, %v470
        %v486 = vadd.f32 %v485, %v471
        %v487 = vadd.f32 %v486, %v472
        %v488 = vadd.f32 %v487, %v473
        %v489 = vadd.f32 %v488, %v474
        %v490 = vadd.f32 %v489, %v475
        %v491 = vadd.f32 %v490, %v476
        %v492 = vadd.f32 %v491, %v477
        %v493 = vadd.f32 %v492, %v478
        %v494 = vadd.f32 %v493, %v479
        %v495 = vadd.f32 %v494, %v480
        %v496 = vadd.f32 %v495, %v481
        %v497 = vadd.f32 %v496, %v482
        %v498 = vadd.f32 %v497, %v483
        %499 = vadd.xlane.f32.xlu0 %v498
        %v500 = vpop.xlane.xlu0 %499
        %v501 = vrot.slane %v500, 4
        %v502 = vadd.f32 %v500, %v501
        %v503 = vrot.slane %v502, 2
        %v504 = vadd.f32 %v502, %v503
        %v505 = vrot.slane %v504, 1
        %v506 = vadd.f32 %v504, %v505
        %s507 = vtos %v506
        %v508 = vstv %s507
        %v509 = vadd.f32 %v467, %v508
        %vm510 = vcmask 0
        %511 = vst.msk [vmem:[#allocation2] sm:$0x1] %vm510, %v509
        %v512 = vld [vmem:[#allocation3] sm:$0x1]
        %v513 = vadd.f32 %v419, %v451
        %v514 = vadd.f32 %v420, %v452
        %v515 = vadd.f32 %v421, %v453
        %v516 = vadd.f32 %v422, %v454
        %v517 = vadd.f32 %v423, %v455
        %v518 = vadd.f32 %v424, %v456
        %v519 = vadd.f32 %v425, %v457
        %v520 = vadd.f32 %v426, %v458
        %v521 = vadd.f32 %v427, %v459
        %v522 = vadd.f32 %v428, %v460
        %v523 = vadd.f32 %v429, %v461
        %v524 = vadd.f32 %v430, %v462
        %v525 = vadd.f32 %v431, %v463
        %v526 = vadd.f32 %v432, %v464
        %v527 = vadd.f32 %v433, %v465
        %v528 = vadd.f32 %v434, %v466
        %vm529 = vcmp.ge.f32.partialorder %v513, 1.0
        %vm530 = vcmp.ge.f32.partialorder %v514, 1.0
        %vm531 = vcmp.ge.f32.partialorder %v515, 1.0
        %vm532 = vcmp.ge.f32.partialorder %v516, 1.0
        %vm533 = vcmp.ge.f32.partialorder %v517, 1.0
        %vm534 = vcmp.ge.f32.partialorder %v518, 1.0
        %vm535 = vcmp.ge.f32.partialorder %v519, 1.0
        %vm536 = vcmp.ge.f32.partialorder %v520, 1.0
        %vm537 = vcmp.ge.f32.partialorder %v521, 1.0
        %vm538 = vcmp.ge.f32.partialorder %v522, 1.0
        %vm539 = vcmp.ge.f32.partialorder %v523, 1.0
        %vm540 = vcmp.ge.f32.partialorder %v524, 1.0
        %vm541 = vcmp.ge.f32.partialorder %v525, 1.0
        %vm542 = vcmp.ge.f32.partialorder %v526, 1.0
        %vm543 = vcmp.ge.f32.partialorder %v527, 1.0
        %vm544 = vcmp.ge.f32.partialorder %v528, 1.0
        %v545 = vsel %vm529, 1.0, 0.0
        %v546 = vsel %vm530, 1.0, 0.0
        %v547 = vsel %vm531, 1.0, 0.0
        %v548 = vsel %vm532, 1.0, 0.0
        %v549 = vsel %vm533, 1.0, 0.0
        %v550 = vsel %vm534, 1.0, 0.0
        %v551 = vsel %vm535, 1.0, 0.0
        %v552 = vsel %vm536, 1.0, 0.0
        %v553 = vsel %vm537, 1.0, 0.0
        %v554 = vsel %vm538, 1.0, 0.0
        %v555 = vsel %vm539, 1.0, 0.0
        %v556 = vsel %vm540, 1.0, 0.0
        %v557 = vsel %vm541, 1.0, 0.0
        %v558 = vsel %vm542, 1.0, 0.0
        %v559 = vsel %vm543, 1.0, 0.0
        %v560 = vsel %vm544, 1.0, 0.0
        %v561 = vadd.f32 %v545, %v546
        %v562 = vadd.f32 %v561, %v547
        %v563 = vadd.f32 %v562, %v548
        %v564 = vadd.f32 %v563, %v549
        %v565 = vadd.f32 %v564, %v550
        %v566 = vadd.f32 %v565, %v551
        %v567 = vadd.f32 %v566, %v552
        %v568 = vadd.f32 %v567, %v553
        %v569 = vadd.f32 %v568, %v554
        %v570 = vadd.f32 %v569, %v555
        %v571 = vadd.f32 %v570, %v556
        %v572 = vadd.f32 %v571, %v557
        %v573 = vadd.f32 %v572, %v558
        %v574 = vadd.f32 %v573, %v559
        %v575 = vadd.f32 %v574, %v560
        %576 = vadd.xlane.f32.xlu0 %v575
        %v577 = vpop.xlane.xlu0 %576
        %v578 = vrot.slane %v577, 4
        %v579 = vadd.f32 %v577, %v578
        %v580 = vrot.slane %v579, 2
        %v581 = vadd.f32 %v579, %v580
        %v582 = vrot.slane %v581, 1
        %v583 = vadd.f32 %v581, %v582
        %s584 = vtos %v583
        %v585 = vstv %s584
        %v586 = vadd.f32 %v512, %v585
        %587 = vst.msk [vmem:[#allocation3] sm:$0x1] %vm510, %v586
        %v588 = vld [vmem:[%s313] sm:$0xff]
        %v589 = vld [vmem:[%s313 + $0x8] sm:$0xff]
        %v590 = vld [vmem:[%s313 + $0x10] sm:$0xff]
        %v591 = vld [vmem:[%s313 + $0x18] sm:$0xff]
        %v592 = vld [vmem:[%s313 + $0x20] sm:$0xff]
        %v593 = vld [vmem:[%s313 + $0x28] sm:$0xff]
        %v594 = vld [vmem:[%s313 + $0x30] sm:$0xff]
        %v595 = vld [vmem:[%s313 + $0x38] sm:$0xff]
        %v596 = vld [vmem:[%s313 + $0x40] sm:$0xff]
        %v597 = vld [vmem:[%s313 + $0x48] sm:$0xff]
        %v598 = vld [vmem:[%s313 + $0x50] sm:$0xff]
        %v599 = vld [vmem:[%s313 + $0x58] sm:$0xff]
        %v600 = vld [vmem:[%s313 + $0x60] sm:$0xff]
        %v601 = vld [vmem:[%s313 + $0x68] sm:$0xff]
        %v602 = vld [vmem:[%s313 + $0x70] sm:$0xff]
        %v603 = vld [vmem:[%s313 + $0x78] sm:$0xff]
        %v604 = vld [vmem:[#allocation4] sm:$0x1]
        %v605 = vadd.f32 %v588, %v589
        %v606 = vadd.f32 %v605, %v590
        %v607 = vadd.f32 %v606, %v591
        %v608 = vadd.f32 %v607, %v592
        %v609 = vadd.f32 %v608, %v593
        %v610 = vadd.f32 %v609, %v594
        %v611 = vadd.f32 %v610, %v595
        %v612 = vadd.f32 %v611, %v596
        %v613 = vadd.f32 %v612, %v597
        %v614 = vadd.f32 %v613, %v598
        %v615 = vadd.f32 %v614, %v599
        %v616 = vadd.f32 %v615, %v600
        %v617 = vadd.f32 %v616, %v601
        %v618 = vadd.f32 %v617, %v602
        %v619 = vadd.f32 %v618, %v603
        %620 = vadd.xlane.f32.xlu0 %v619
        %v621 = vpop.xlane.xlu0 %620
        %v622 = vrot.slane %v621, 4
        %v623 = vadd.f32 %v621, %v622
        %v624 = vrot.slane %v623, 2
        %v625 = vadd.f32 %v623, %v624
        %v626 = vrot.slane %v625, 1
        %v627 = vadd.f32 %v625, %v626
        %s628 = vtos %v627
        %v629 = vstv %s628
        %v630 = vadd.f32 %v604, %v629
        %631 = vst.msk [vmem:[#allocation4] sm:$0x1] %vm510, %v630
        %v632 = vld [vmem:[#allocation5] sm:$0x1]
        %v633 = vmul.f32 %v588, %v588
        %v634 = vmul.f32 %v589, %v589
        %v635 = vmul.f32 %v590, %v590
        %v636 = vmul.f32 %v591, %v591
        %v637 = vmul.f32 %v592, %v592
        %v638 = vmul.f32 %v593, %v593
        %v639 = vmul.f32 %v594, %v594
        %v640 = vmul.f32 %v595, %v595
        %v641 = vmul.f32 %v596, %v596
        %v642 = vmul.f32 %v597, %v597
        %v643 = vmul.f32 %v598, %v598
        %v644 = vmul.f32 %v599, %v599
        %v645 = vmul.f32 %v600, %v600
        %v646 = vmul.f32 %v601, %v601
        %v647 = vmul.f32 %v602, %v602
        %v648 = vmul.f32 %v603, %v603
        %v649 = vadd.f32 %v633, %v634
        %v650 = vadd.f32 %v649, %v635
        %v651 = vadd.f32 %v650, %v636
        %v652 = vadd.f32 %v651, %v637
        %v653 = vadd.f32 %v652, %v638
        %v654 = vadd.f32 %v653, %v639
        %v655 = vadd.f32 %v654, %v640
        %v656 = vadd.f32 %v655, %v641
        %v657 = vadd.f32 %v656, %v642
        %v658 = vadd.f32 %v657, %v643
        %v659 = vadd.f32 %v658, %v644
        %v660 = vadd.f32 %v659, %v645
        %v661 = vadd.f32 %v660, %v646
        %v662 = vadd.f32 %v661, %v647
        %v663 = vadd.f32 %v662, %v648
        %664 = vadd.xlane.f32.xlu0 %v663
        %v665 = vpop.xlane.xlu0 %664
        %v666 = vrot.slane %v665, 4
        %v667 = vadd.f32 %v665, %v666
        %v668 = vrot.slane %v667, 2
        %v669 = vadd.f32 %v667, %v668
        %v670 = vrot.slane %v669, 1
        %v671 = vadd.f32 %v669, %v670
        %s672 = vtos %v671
        %v673 = vstv %s672
        %v674 = vadd.f32 %v632, %v673
        %675 = vst.msk [vmem:[#allocation5] sm:$0x1] %vm510, %v674
        %v676 = vld [vmem:[%s319] sm:$0xff]
        %v677 = vld [vmem:[%s319 + $0x8] sm:$0xff]
        %v678 = vld [vmem:[%s319 + $0x10] sm:$0xff]
        %v679 = vld [vmem:[%s319 + $0x18] sm:$0xff]
        %v680 = vld [vmem:[%s319 + $0x20] sm:$0xff]
        %v681 = vld [vmem:[%s319 + $0x28] sm:$0xff]
        %v682 = vld [vmem:[%s319 + $0x30] sm:$0xff]
        %v683 = vld [vmem:[%s319 + $0x38] sm:$0xff]
        %v684 = vld [vmem:[%s319 + $0x40] sm:$0xff]
        %v685 = vld [vmem:[%s319 + $0x48] sm:$0xff]
        %v686 = vld [vmem:[%s319 + $0x50] sm:$0xff]
        %v687 = vld [vmem:[%s319 + $0x58] sm:$0xff]
        %v688 = vld [vmem:[%s319 + $0x60] sm:$0xff]
        %v689 = vld [vmem:[%s319 + $0x68] sm:$0xff]
        %v690 = vld [vmem:[%s319 + $0x70] sm:$0xff]
        %v691 = vld [vmem:[%s319 + $0x78] sm:$0xff]
        %v692 = vld [vmem:[%s325] sm:$0xff]
        %v693 = vld [vmem:[%s325 + $0x8] sm:$0xff]
        %v694 = vld [vmem:[%s325 + $0x10] sm:$0xff]
        %v695 = vld [vmem:[%s325 + $0x18] sm:$0xff]
        %v696 = vld [vmem:[%s325 + $0x20] sm:$0xff]
        %v697 = vld [vmem:[%s325 + $0x28] sm:$0xff]
        %v698 = vld [vmem:[%s325 + $0x30] sm:$0xff]
        %v699 = vld [vmem:[%s325 + $0x38] sm:$0xff]
        %v700 = vld [vmem:[%s325 + $0x40] sm:$0xff]
        %v701 = vld [vmem:[%s325 + $0x48] sm:$0xff]
        %v702 = vld [vmem:[%s325 + $0x50] sm:$0xff]
        %v703 = vld [vmem:[%s325 + $0x58] sm:$0xff]
        %v704 = vld [vmem:[%s325 + $0x60] sm:$0xff]
        %v705 = vld [vmem:[%s325 + $0x68] sm:$0xff]
        %v706 = vld [vmem:[%s325 + $0x70] sm:$0xff]
        %v707 = vld [vmem:[%s325 + $0x78] sm:$0xff]
        %v708 = vsub.f32 %v676, %v692
        %v709 = vsub.f32 %v677, %v693
        %v710 = vsub.f32 %v678, %v694
        %v711 = vsub.f32 %v679, %v695
        %v712 = vsub.f32 %v680, %v696
        %v713 = vsub.f32 %v681, %v697
        %v714 = vsub.f32 %v682, %v698
        %v715 = vsub.f32 %v683, %v699
        %v716 = vsub.f32 %v684, %v700
        %v717 = vsub.f32 %v685, %v701
        %v718 = vsub.f32 %v686, %v702
        %v719 = vsub.f32 %v687, %v703
        %v720 = vsub.f32 %v688, %v704
        %v721 = vsub.f32 %v689, %v705
        %v722 = vsub.f32 %v690, %v706
        %v723 = vsub.f32 %v691, %v707
        %v724 = vld [vmem:[#allocation6] sm:$0x1]
        %v725 = vmul.f32 %v708, %v708
        %v726 = vmul.f32 %v709, %v709
        %v727 = vmul.f32 %v710, %v710
        %v728 = vmul.f32 %v711, %v711
        %v729 = vmul.f32 %v712, %v712
        %v730 = vmul.f32 %v713, %v713
        %v731 = vmul.f32 %v714, %v714
        %v732 = vmul.f32 %v715, %v715
        %v733 = vmul.f32 %v716, %v716
        %v734 = vmul.f32 %v717, %v717
        %v735 = vmul.f32 %v718, %v718
        %v736 = vmul.f32 %v719, %v719
        %v737 = vmul.f32 %v720, %v720
        %v738 = vmul.f32 %v721, %v721
        %v739 = vmul.f32 %v722, %v722
        %v740 = vmul.f32 %v723, %v723
        %v741 = vadd.f32 %v725, %v726
        %v742 = vadd.f32 %v741, %v727
        %v743 = vadd.f32 %v742, %v728
        %v744 = vadd.f32 %v743, %v729
        %v745 = vadd.f32 %v744, %v730
        %v746 = vadd.f32 %v745, %v731
        %v747 = vadd.f32 %v746, %v732
        %v748 = vadd.f32 %v747, %v733
        %v749 = vadd.f32 %v748, %v734
        %v750 = vadd.f32 %v749, %v735
        %v751 = vadd.f32 %v750, %v736
        %v752 = vadd.f32 %v751, %v737
        %v753 = vadd.f32 %v752, %v738
        %v754 = vadd.f32 %v753, %v739
        %v755 = vadd.f32 %v754, %v740
        %756 = vadd.xlane.f32.xlu0 %v755
        %v757 = vpop.xlane.xlu0 %756
        %v758 = vrot.slane %v757, 4
        %v759 = vadd.f32 %v757, %v758
        %v760 = vrot.slane %v759, 2
        %v761 = vadd.f32 %v759, %v760
        %v762 = vrot.slane %v761, 1
        %v763 = vadd.f32 %v761, %v762
        %s764 = vtos %v763
        %v765 = vstv %s764
        %v766 = vadd.f32 %v724, %v765
        %767 = vst.msk [vmem:[#allocation6] sm:$0x1] %vm510, %v766
        %p768 = scmp.eq.s32.totalorder %s20, 1
        // Predicated region
        $region45: #{build_model_kd_forward.3} parent=39 // pred_check
          %p769 = pneg %p768
        $region46: #{build_model_kd_forward.3} parent=39 // pred_check_branch
          %771 = sbr.rel (%p769) target = $region48
        $region47: #{build_model_kd_forward.3} parent=39 // pred_region
          %v772 = vld [vmem:[#allocation2] sm:$0x1]
          %v773 = vld [vmem:[#allocation3] sm:$0x1]
          %v774 = vadd.f32 %v773, 1e-07
          %v775 = vrcp.pop %v774
          %v776 = vmul.f32 %v772, %v775
          %v777 = vld [vmem:[#allocation5] sm:$0x1]
          %v778 = vmul.f32 %v776, 2.0
          %v779 = vld [vmem:[#allocation4] sm:$0x1]
          %v780 = vmul.f32 %v778, %v779
          %v781 = vsub.f32 %v777, %v780
          %v782 = vmul.f32 %v776, 32768.0
          %v783 = vmul.f32 %v782, %v776
          %v784 = vadd.f32 %v781, %v783
          %v785 = vmul.f32 %v784, 3.0517578e-05
          %786 = vst.msk [vmem:[#allocation9] sm:$0x1] %vm510, %v785
          %v787 = vld [vmem:[#allocation6] sm:$0x1]
          %v788 = vmul.f32 %v787, 3.0517578e-05
          %789 = vst.msk [vmem:[#allocation7] sm:$0x1] %vm510, %v788
        $region48: #{build_model_kd_forward.3} parent=39 // pred_fallthru
          _
        // Predicated region
        $region49: #{build_model_kd_forward.3} parent=39 // pred_check
          %p790 = pneg %p163
        $region50: #{build_model_kd_forward.3} parent=39 // pred_check_branch
          %792 = sbr.rel (%p790) target = $region52
        $region51: #{build_model_kd_forward.3} parent=39 // pred_region
          %s794 = ssub.s32 16, 16
          %795 = vsyncadd [#allocation8], %s794
          %s797 = sshll.u32 [#allocation7], 4
          %s798 = int_to_ptr.vmem [resolvable:$true] %s797
          %800 = dma.vmem_to_hbm [thread:$0]  %s798, 16, %s5, [#allocation8]
        $region52: #{build_model_kd_forward.3} parent=39 // pred_fallthru
          _
        // Predicated region
        $region53: #{build_model_kd_forward.3} parent=39 // pred_check
          %p801 = pneg %p184
        $region54: #{build_model_kd_forward.3} parent=39 // pred_check_branch
          %803 = sbr.rel (%p801) target = $region56
        $region55: #{build_model_kd_forward.3} parent=39 // pred_region
          %s805 = ssub.s32 16, 16
          %806 = vsyncadd [#allocation10], %s805
          %s808 = sshll.u32 [#allocation9], 4
          %s809 = int_to_ptr.vmem [resolvable:$true] %s808
          %811 = dma.vmem_to_hbm [thread:$0]  %s809, 16, %s6, [#allocation10]
        $region56: #{build_model_kd_forward.3} parent=39 // pred_fallthru
          _
        // Predicated region
        $region57: #{build_model_kd_forward.3} parent=39 // pred_check
          %p812 = pneg %p163
        $region58: #{build_model_kd_forward.3} parent=39 // pred_check_branch
          %814 = sbr.rel (%p812) target = $region60
        $region59: #{build_model_kd_forward.3} parent=39 // pred_region
          %815 = dma.done [#allocation8], 16
        $region60: #{build_model_kd_forward.3} parent=39 // pred_fallthru
          _
        // Predicated region
        $region61: #{build_model_kd_forward.3} parent=39 // pred_check
          %p816 = pneg %p184
        $region62: #{build_model_kd_forward.3} parent=39 // pred_check_branch
          %818 = sbr.rel (%p816) target = $region64
        $region63: #{build_model_kd_forward.3} parent=39 // pred_region
          %819 = dma.done [#allocation10], 16
        $region64: #{build_model_kd_forward.3} parent=39 // pred_fallthru
          _
      $region40: #{build_model_kd_forward.3} parent=5 // pred_fallthru
        _
      %p820 = scmp.le.s32.totalorder 2, %s15
      // Predicated region
      $region65: #{build_model_kd_forward.3} parent=5 // pred_check
        %p821 = pneg %p820
      $region66: #{build_model_kd_forward.3} parent=5 // pred_check_branch
        %823 = sbr.rel (%p821) target = $region68
      $region67: #{build_model_kd_forward.3} parent=5 // pred_region
        %s824 = ssub.s32 %s15, 2
      $region68: #{build_model_kd_forward.3} parent=5 // pred_fallthru
        _
    $region6: #{build_model_kd_forward.3} parent=1 // loop_footer
      %s19 = sadd.s32 1, %s15
    $region7: #{build_model_kd_forward.3} parent=1 // loop_footer_branch
      %14 = sbr.rel target = $region3
    $region8: #{build_model_kd_forward.3} parent=1 // loop_exit
      _
    %825 = vsyncpa [#allocation8], 1
    %s826 = scalar_lea.sflag [#allocation8], 1
    %827 = vsyncpa %s826, 1
    %828 = vsyncpa [#allocation10], 1

</llo_original>
